<compile_context>
chip_gen: v5e
topology: v5e:2x2
jax: 0.10.0
libtpu: 0.0.40
codegen_flags: <defaults>
</compile_context>

<pallas_src>
import functools

import jax
import jax.numpy as jnp
from jax import lax
from jax.experimental import pallas as pl
from jax.experimental.pallas import tpu as pltpu

_LANE = 128
_SUBLANE = 8


def _relu6(x):
    return jnp.minimum(jnp.maximum(x, 0.0), 6.0)


def _round_up(n, m):
    return ((n + m - 1) // m) * m


def _ds(start, size, step):
    return pl.ds(start, size) if step == 1 else pl.ds(start, size, step)


def _vmem_limit_bytes():
    """Generation-aware VMEM budget (75% of capacity, capped at 100 MiB)."""
    cap = 64 * 1024 * 1024  # conservative default: v7x per-TensorCore VMEM
    try:
        info = pltpu.get_tpu_info()
        for name in ("vmem_capacity_bytes", "vmem_bytes", "vmem_size_bytes"):
            v = getattr(info, name, None)
            if isinstance(v, int) and v > 0:
                cap = v
                break
    except Exception:
        pass
    return max(32 * 1024 * 1024, min(cap * 3 // 4, 100 * 1024 * 1024))


def _tile_vmem_bytes(TH, *, stride, H, W, Wo, Cin, Cmid_p, Oup_p, wbytes):
    """Rough per-grid-step VMEM working-set estimate for a row tile of TH."""
    th_in = (TH - 1) * stride + 3

    def vm(rows, sub, lane, itemsize=4):
        return rows * _round_up(sub, _SUBLANE) * _round_up(lane, _LANE) * itemsize

    b = vm(th_in, W + 2, Cmid_p)                 # h1 scratch buffer
    b += vm(th_in, W, Cmid_p)                    # h1 value before the store
    b += 3 * vm(TH, Wo, Cmid_p)                  # taps / acc / h2 temporaries
    b += 2 * vm(TH, Wo, Oup_p)                   # double-buffered output tile
    b += 2 * vm(H, W, Cin)                       # double-buffered input image
    b += 2 * (vm(1, Cin, Cmid_p, wbytes) + vm(1, Cmid_p, Oup_p, wbytes))
    b += 2 * (vm(1, 11, Cmid_p) + vm(1, 1, Oup_p))   # biases + dw taps
    return b


def _pick_row_tile(Ho, requested, budget, tile_kwargs):
    if requested is not None:
        if Ho % requested != 0:
            raise ValueError("row_tile must divide the number of output rows")
        return requested
    best = 1
    for t in range(1, min(Ho, 64) + 1):
        if Ho % t == 0 and _tile_vmem_bytes(t, **tile_kwargs) <= budget:
            best = t
    return best


def _bottleneck_kernel(x_ref, w1_ref, b1_ref, dw_ref, b2_ref, w3_ref, b3_ref,
                       o_ref, h1s_ref, *, stride, use_res):
    H, W, Cin = x_ref.shape          # full (unpadded-channel) input image
    TH, Wo, Oup_p = o_ref.shape      # this grid step's output row tile
    Cmid = w1_ref.shape[1]
    th_in = h1s_ref.shape[0]         # (TH-1)*stride + 3
    th_core = th_in - 2

    r = pl.program_id(1)
    row0 = pl.multiple_of(r * (TH * stride), TH * stride)  # first 3x3 center row

    # ---- input row window: th_core center rows + one halo row on each side.
    # Halo rows are clamped reads; their conv1 output is zeroed below (the 3x3
    # zero-pads h1, not x, so the mask must come after ReLU6(conv1 + bias)).
    x_core = x_ref[pl.ds(row0, th_core)]
    x_top = x_ref[pl.ds(jnp.maximum(row0 - 1, 0), 1)]
    x_bot = x_ref[pl.ds(jnp.minimum(row0 + th_core, H - 1), 1)]
    xwin = jnp.concatenate([x_top, x_core, x_bot], axis=0)      # (th_in, W, Cin)

    # ---- stage 1: 1x1 expand conv (MXU, bf16 in / f32 acc) + BN + ReLU6 ------
    h1 = jnp.dot(xwin.reshape(th_in * W, Cin).astype(w1_ref.dtype), w1_ref[...],
                 preferred_element_type=jnp.float32)
    h1 = _relu6(h1 + b1_ref[...]).reshape(th_in, W, Cmid)

    # ---- stage 1.5: write h1 into the column-padded scratch buffer ----------
    # Buffer columns: [0] and [W+1] are the depthwise zero padding, [1..W] is
    # the image.  Out-of-image halo rows get two tiny conditional row stores.
    zcol = jnp.zeros((th_in, 1, Cmid), jnp.float32)
    h1s_ref[:, pl.ds(0, 1), :] = zcol
    h1s_ref[:, pl.ds(W + 1, 1), :] = zcol
    h1s_ref[:, pl.ds(1, W), :] = h1

    zrow = jnp.zeros((1, W, Cmid), jnp.float32)

    @pl.when(row0 == 0)
    def _():
        h1s_ref[pl.ds(0, 1), pl.ds(1, W), :] = zrow

    @pl.when(row0 + th_core >= H)
    def _():
        h1s_ref[pl.ds(th_in - 1, 1), pl.ds(1, W), :] = zrow

    # ---- stage 2: 3x3 depthwise conv + BN + ReLU6 ----------------------------
    # Taps are read directly at output resolution (stride-2 strided loads when
    # downsampling), so the 9-tap multiply-add does only TH*Wo work and the
    # old post-accumulation subsampling / selection matmul is gone.
    dw = dw_ref[...]                                            # (9, Cmid)
    acc = jnp.zeros((TH, Wo, Cmid), jnp.float32)
    for di in range(3):
        for dj in range(3):
            tap = h1s_ref[_ds(di, TH, stride), _ds(dj, Wo, stride), :]
            acc = acc + tap * dw[3 * di + dj]
    h2 = _relu6(acc + b2_ref[0])                                # (TH, Wo, Cmid)

    # ---- stage 3: 1x1 project conv (MXU, bf16 in / f32 acc) + BN -------------
    h3 = jnp.dot(h2.reshape(TH * Wo, Cmid).astype(w3_ref.dtype), w3_ref[...],
                 preferred_element_type=jnp.float32)
    h3 = h3 + b3_ref[...]                                       # (TH*Wo, Oup_p)

    if use_res:
        # stride == 1 and Cin == Oup.  Lane-pad x_core from Cin to Oup_p with a
        # tiny exact f32 identity matmul (avoids lane-dim concatenation).
        eye = (lax.broadcasted_iota(jnp.int32, (Cin, Oup_p), 0)
               == lax.broadcasted_iota(jnp.int32, (Cin, Oup_p), 1)
               ).astype(jnp.float32)
        h3 = h3 + jnp.dot(x_core.reshape(TH * Wo, Cin), eye,
                          preferred_element_type=jnp.float32)

    o_ref[...] = h3.reshape(TH, Wo, Oup_p).astype(o_ref.dtype)


@functools.partial(jax.jit,
                   static_argnames=("stride", "use_res", "row_tile", "mxu_bf16"))
def inverted_residual_bottleneck(x_nchw, params, *, stride, use_res,
                                 row_tile=None, mxu_bf16=True):
    """x_nchw: (B, Cin, H, W) float32.  Returns (B, Oup, Ho, Wo)."""
    B, Cin, H, W = x_nchw.shape
    w1, b1, dw, b2, w3, b3 = params
    Cmid, Oup = w1.shape[1], w3.shape[1]
    if stride not in (1, 2):
        raise NotImplementedError("stride must be 1 or 2")
    Ho = (H - 1) // stride + 1
    Wo = (W - 1) // stride + 1

    Cmid_p = _round_up(Cmid, _LANE)
    Oup_p = _round_up(Oup, _LANE)
    wdtype = jnp.bfloat16 if mxu_bf16 else jnp.float32
    wbytes = 2 if mxu_bf16 else 4

    # NCHW -> NHWC.  The input channel dim is left UNPADDED (MobileNet Cin is
    # small; padding it to 128 only inflates HBM traffic).  Weights / biases /
    # output stay lane-dense (padded to 128).
    # TODO(synk): in a full network, keep activations in NHWC between blocks so
    #             the transposes and the trailing channel slice disappear.
    x = jnp.transpose(x_nchw, (0, 2, 3, 1)).astype(jnp.float32)

    w1p = jnp.pad(w1, ((0, 0), (0, Cmid_p - Cmid))).astype(wdtype)
    b1p = jnp.pad(b1.reshape(1, -1), ((0, 0), (0, Cmid_p - Cmid)))
    dwp = jnp.pad(dw.reshape(9, -1), ((0, 0), (0, Cmid_p - Cmid)))
    b2p = jnp.pad(b2.reshape(1, -1), ((0, 0), (0, Cmid_p - Cmid)))
    w3p = jnp.pad(w3, ((0, Cmid_p - Cmid), (0, Oup_p - Oup))).astype(wdtype)
    b3p = jnp.pad(b3.reshape(1, -1), ((0, 0), (0, Oup_p - Oup)))

    vmem_limit = _vmem_limit_bytes()
    tile_kwargs = dict(stride=stride, H=H, W=W, Wo=Wo, Cin=Cin,
                       Cmid_p=Cmid_p, Oup_p=Oup_p, wbytes=wbytes)
    TH = _pick_row_tile(Ho, row_tile, int(vmem_limit * 0.85), tile_kwargs)
    th_in = (TH - 1) * stride + 3
    n_row_tiles = Ho // TH

    kernel = functools.partial(_bottleneck_kernel, stride=stride,
                               use_res=use_res)

    flops = int(2 * B * H * W * Cin * Cmid_p        # 1x1 expand
                + 2 * 9 * B * Ho * Wo * Cmid_p      # 3x3 depthwise
                + 2 * B * Ho * Wo * Cmid_p * Oup_p)  # 1x1 project
    bytes_accessed = int(4 * x.size
                         + wbytes * (w1p.size + w3p.size)
                         + 4 * (b1p.size + dwp.size + b2p.size + b3p.size)
                         + 4 * B * Ho * Wo * Oup_p)

    out = pl.pallas_call(
        kernel,
        out_shape=jax.ShapeDtypeStruct((B, Ho, Wo, Oup_p), jnp.float32),
        grid=(B, n_row_tiles),
        in_specs=[
            # Small unpadded-channel input image resident per batch image.
            # TODO(synk): for very large H, halo-DMA TH*stride+2 rows per tile.
            pl.BlockSpec((None, H, W, Cin), lambda b, r: (b, 0, 0, 0)),
            pl.BlockSpec((Cin, Cmid_p), lambda b, r: (0, 0)),
            pl.BlockSpec((1, Cmid_p), lambda b, r: (0, 0)),
            pl.BlockSpec((9, Cmid_p), lambda b, r: (0, 0)),
            pl.BlockSpec((1, Cmid_p), lambda b, r: (0, 0)),
            pl.BlockSpec((Cmid_p, Oup_p), lambda b, r: (0, 0)),
            pl.BlockSpec((1, Oup_p), lambda b, r: (0, 0)),
        ],
        out_specs=pl.BlockSpec((None, TH, Wo, Oup_p), lambda b, r: (b, r, 0, 0)),
        scratch_shapes=[pltpu.VMEM((th_in, W + 2, Cmid_p), jnp.float32)],
        compiler_params=pltpu.CompilerParams(
            dimension_semantics=("parallel", "parallel"),
            vmem_limit_bytes=vmem_limit),
        cost_estimate=pl.CostEstimate(flops=flops, transcendentals=0,
                                      bytes_accessed=bytes_accessed),
    )(x, w1p, b1p, dwp, b2p, w3p, b3p)

    out = out[..., :Oup]                               # drop channel padding
    return jnp.transpose(out, (0, 3, 1, 2))            # back to NCHW


def make_params(key, inp, oup, expand_ratio, eps=1e-5):
    """Deterministic synthetic params with BN folded into scale/bias."""
    Cmid = inp * expand_ratio
    ks = jax.random.split(key, 15)

    w1 = 0.1 * jax.random.normal(ks[0], (inp, Cmid), jnp.float32)
    dw = 0.1 * jax.random.normal(ks[1], (3, 3, Cmid), jnp.float32)
    w3 = 0.1 * jax.random.normal(ks[2], (Cmid, oup), jnp.float32)

    def bn_fold(k0, k1, k2, k3, c):
        gamma = 1.0 + 0.1 * jax.random.normal(k0, (c,), jnp.float32)
        beta = 0.1 * jax.random.normal(k1, (c,), jnp.float32)
        mean = 0.1 * jax.random.normal(k2, (c,), jnp.float32)
        var = jnp.abs(jax.random.normal(k3, (c,), jnp.float32)) + 0.5
        scale = gamma / jnp.sqrt(var + eps)
        bias = beta - mean * scale
        return scale, bias

    s1, b1 = bn_fold(ks[3], ks[4], ks[5], ks[6], Cmid)
    s2, b2 = bn_fold(ks[7], ks[8], ks[9], ks[10], Cmid)
    s3, b3 = bn_fold(ks[11], ks[12], ks[13], ks[14], oup)

    w1f = w1 * s1[None, :]
    dwf = dw * s2[None, None, :]
    w3f = w3 * s3[None, :]
    return (w1f, b1.reshape(1, Cmid), dwf, b2.reshape(1, Cmid),
            w3f, b3.reshape(1, oup))


def ref_forward(x_nchw, params, stride, use_res, mxu_bf16=False):
    """Pure-JAX reference with identical (folded) math and matmul dtypes."""
    x = jnp.transpose(x_nchw, (0, 2, 3, 1)).astype(jnp.float32)
    w1, b1, dw, b2, w3, b3 = params
    B, H, W, Cin = x.shape
    Ho = (H - 1) // stride + 1
    Wo = (W - 1) // stride + 1
    mm_dt = jnp.bfloat16 if mxu_bf16 else jnp.float32

    h1 = jnp.einsum('bhwi,io->bhwo', x.astype(mm_dt), w1.astype(mm_dt),
                    preferred_element_type=jnp.float32)
    h1 = _relu6(h1 + b1.reshape(-1))
    padded = jnp.pad(h1, ((0, 0), (1, 1), (1, 1), (0, 0)))
    acc = jnp.zeros((B, Ho, Wo, w1.shape[1]), jnp.float32)
    for di in range(3):
        for dj in range(3):
            acc = acc + padded[:, di:di + stride * (Ho - 1) + 1:stride,
                               dj:dj + stride * (Wo - 1) + 1:stride, :] * dw[di, dj]
    h2 = _relu6(acc + b2.reshape(-1))
    h3 = jnp.einsum('bhwi,io->bhwo', h2.astype(mm_dt), w3.astype(mm_dt),
                    preferred_element_type=jnp.float32)
    h3 = h3 + b3.reshape(-1)
    if use_res:
        h3 = h3 + x
    return jnp.transpose(h3, (0, 3, 1, 2))


if __name__ == "__main__":
    key = jax.random.PRNGKey(0)
    k1, k2, k3, k4 = jax.random.split(key, 4)
    B, H, W = 2, 16, 16

    # Case 1: stride 1, inp == oup -> residual path.
    inp, oup, stride, expand = 4, 4, 1, 6
    x = jax.random.normal(k1, (B, inp, H, W), jnp.float32)
    params = make_params(k2, inp, oup, expand)
    use_res = (stride == 1) and (inp == oup)

    # (a) exact f32 MXU path, auto row tile.
    out = inverted_residual_bottleneck(x, params, stride=stride,
                                       use_res=use_res, mxu_bf16=False)
    out = jax.block_until_ready(out)
    ref = ref_forward(x, params, stride, use_res, mxu_bf16=False)
    assert out.shape == (B, oup, H, W), out.shape
    assert jnp.allclose(out, ref, atol=1e-4, rtol=1e-4), "mismatch (s1, f32)"

    # (b) bf16 MXU path, two row tiles (exercises cross-tile halos).
    out_bf = inverted_residual_bottleneck(x, params, stride=stride,
                                          use_res=use_res, row_tile=8,
                                          mxu_bf16=True)
    out_bf = jax.block_until_ready(out_bf)
    ref_bf = ref_forward(x, params, stride, use_res, mxu_bf16=True)
    assert jnp.allclose(out_bf, ref_bf, atol=1e-2, rtol=1e-2), "mismatch (s1, bf16)"

    # Case 2: stride 2, inp != oup -> downsampling path, no residual.
    inp2, oup2, stride2, expand2 = 4, 8, 2, 6
    x2 = jax.random.normal(k3, (B, inp2, H, W), jnp.float32)
    params2 = make_params(k4, inp2, oup2, expand2)

    out2 = inverted_residual_bottleneck(x2, params2, stride=stride2,
                                        use_res=False, row_tile=4,
                                        mxu_bf16=False)
    out2 = jax.block_until_ready(out2)
    ref2 = ref_forward(x2, params2, stride2, False, mxu_bf16=False)
    assert out2.shape == (B, oup2, H // 2, W // 2), out2.shape
    assert jnp.allclose(out2, ref2, atol=1e-4, rtol=1e-4), "mismatch (s2, f32)"

    out2_bf = inverted_residual_bottleneck(x2, params2, stride=stride2,
                                           use_res=False, mxu_bf16=True)
    out2_bf = jax.block_until_ready(out2_bf)
    ref2_bf = ref_forward(x2, params2, stride2, False, mxu_bf16=True)
    assert jnp.allclose(out2_bf, ref2_bf, atol=1e-2, rtol=1e-2), "mismatch (s2, bf16)"

    print("KERNEL_OK")
</pallas_src>

<mosaic_0001>
module attributes {stable_mosaic.version = 11 : i64} {
  func.func @_bottleneck_kernel(%arg0: i32, %arg1: i32, %arg2: memref<1x16x16x4xf32, #tpu.memory_space<vmem>>, %arg3: memref<4x128xf32, #tpu.memory_space<vmem>>, %arg4: memref<1x128xf32, #tpu.memory_space<vmem>>, %arg5: memref<9x128xf32, #tpu.memory_space<vmem>>, %arg6: memref<1x128xf32, #tpu.memory_space<vmem>>, %arg7: memref<128x128xf32, #tpu.memory_space<vmem>>, %arg8: memref<1x128xf32, #tpu.memory_space<vmem>>, %arg9: memref<1x16x16x128xf32, #tpu.memory_space<vmem>>, %arg10: memref<18x18x128xf32, #tpu.memory_space<vmem>>) attributes {dimension_semantics = [#tpu.dimension_semantics<parallel>, #tpu.dimension_semantics<parallel>], iteration_bounds = array<i64: 2, 1>, scalar_prefetch = 0 : i64, scratch_operands = 1 : i64, tpu.core_type = #tpu.core_type<tc>, window_params = [{transform_indices = @transform_0, window_bounds = array<i64: 1, 16, 16, 4>}, {pipeline_mode = #tpu.pipeline_mode<synchronous>, transform_indices = @transform_1, window_bounds = array<i64: 4, 128>}, {pipeline_mode = #tpu.pipeline_mode<synchronous>, transform_indices = @transform_2, window_bounds = array<i64: 1, 128>}, {pipeline_mode = #tpu.pipeline_mode<synchronous>, transform_indices = @transform_3, window_bounds = array<i64: 9, 128>}, {pipeline_mode = #tpu.pipeline_mode<synchronous>, transform_indices = @transform_4, window_bounds = array<i64: 1, 128>}, {pipeline_mode = #tpu.pipeline_mode<synchronous>, transform_indices = @transform_5, window_bounds = array<i64: 128, 128>}, {pipeline_mode = #tpu.pipeline_mode<synchronous>, transform_indices = @transform_6, window_bounds = array<i64: 1, 128>}, {transform_indices = @transform_7, window_bounds = array<i64: 1, 16, 16, 128>}]} {
    %c16_i32 = arith.constant 16 : i32
    %0 = arith.muli %arg1, %c16_i32 : i32
    %1 = tpu.assume_multiple %0, 16 : i32
    %c0 = arith.constant 0 : index
    %2 = arith.index_cast %1 : i32 to index
    %c0_0 = arith.constant 0 : index
    %c0_1 = arith.constant 0 : index
    %3 = vector.load %arg2[%c0, %2, %c0_0, %c0_1] : memref<1x16x16x4xf32, #tpu.memory_space<vmem>>, vector<1x16x16x4xf32>
    %4 = vector.shape_cast %3 : vector<1x16x16x4xf32> to vector<16x16x4xf32>
    %c1_i32 = arith.constant 1 : i32
    %5 = arith.subi %1, %c1_i32 : i32
    %c0_i32 = arith.constant 0 : i32
    %6 = arith.maxsi %5, %c0_i32 : i32
    %c0_2 = arith.constant 0 : index
    %7 = arith.index_cast %6 : i32 to index
    %c0_3 = arith.constant 0 : index
    %c0_4 = arith.constant 0 : index
    %8 = vector.load %arg2[%c0_2, %7, %c0_3, %c0_4] : memref<1x16x16x4xf32, #tpu.memory_space<vmem>>, vector<1x1x16x4xf32>
    %9 = vector.shape_cast %8 : vector<1x1x16x4xf32> to vector<1x16x4xf32>
    %c16_i32_5 = arith.constant 16 : i32
    %10 = arith.addi %1, %c16_i32_5 : i32
    %c15_i32 = arith.constant 15 : i32
    %11 = arith.minsi %10, %c15_i32 : i32
    %c0_6 = arith.constant 0 : index
    %12 = arith.index_cast %11 : i32 to index
    %c0_7 = arith.constant 0 : index
    %c0_8 = arith.constant 0 : index
    %13 = vector.load %arg2[%c0_6, %12, %c0_7, %c0_8] : memref<1x16x16x4xf32, #tpu.memory_space<vmem>>, vector<1x1x16x4xf32>
    %14 = vector.shape_cast %13 : vector<1x1x16x4xf32> to vector<1x16x4xf32>
    %15 = tpu.concatenate %9, %4, %14 in 0 : vector<1x16x4xf32>, vector<16x16x4xf32>, vector<1x16x4xf32> -> vector<18x16x4xf32>
    %16 = vector.shape_cast %15 : vector<18x16x4xf32> to vector<288x4xf32>
    %c0_9 = arith.constant 0 : index
    %c0_10 = arith.constant 0 : index
    %17 = vector.load %arg3[%c0_9, %c0_10] : memref<4x128xf32, #tpu.memory_space<vmem>>, vector<4x128xf32>
    %cst = arith.constant dense<0.000000e+00> : vector<288x128xf32>
    %18 = tpu.matmul %16, %17, %cst {dimension_numbers = #tpu.dot_dimension_numbers<[1], [0], [0], [1], [0, 0, 1, 1], [], []>} : vector<288x4xf32>, vector<4x128xf32>, vector<288x128xf32> -> vector<288x128xf32>
    %c0_11 = arith.constant 0 : index
    %c0_12 = arith.constant 0 : index
    %19 = vector.load %arg4[%c0_11, %c0_12] : memref<1x128xf32, #tpu.memory_space<vmem>>, vector<1x128xf32>
    %20 = vector.broadcast %19 : vector<1x128xf32> to vector<288x128xf32>
    %21 = arith.addf %18, %20 : vector<288x128xf32>
    %cst_13 = arith.constant 0.000000e+00 : f32
    %22 = vector.broadcast %cst_13 : f32 to vector<288x128xf32>
    %23 = arith.maximumf %21, %22 : vector<288x128xf32>
    %cst_14 = arith.constant 6.000000e+00 : f32
    %24 = vector.broadcast %cst_14 : f32 to vector<288x128xf32>
    %25 = arith.minimumf %23, %24 : vector<288x128xf32>
    %26 = vector.shape_cast %25 : vector<288x128xf32> to vector<18x16x128xf32>
    %cst_15 = arith.constant 0.000000e+00 : f32
    %27 = vector.broadcast %cst_15 : f32 to vector<18x1x128xf32>
    %c0_16 = arith.constant 0 : index
    %c0_17 = arith.constant 0 : index
    %c0_18 = arith.constant 0 : index
    %28 = vector.load %arg10[%c0_16, %c0_17, %c0_18] : memref<18x18x128xf32, #tpu.memory_space<vmem>>, vector<18x1x128xf32>
    tpu.vector_store %arg10[%c0_16, %c0_17, %c0_18], %27 {strides = array<i32>} : memref<18x18x128xf32, #tpu.memory_space<vmem>>, vector<18x1x128xf32>,
    %c0_19 = arith.constant 0 : index
    %c17 = arith.constant 17 : index
    %c0_20 = arith.constant 0 : index
    %29 = vector.load %arg10[%c0_19, %c17, %c0_20] : memref<18x18x128xf32, #tpu.memory_space<vmem>>, vector<18x1x128xf32>
    tpu.vector_store %arg10[%c0_19, %c17, %c0_20], %27 {strides = array<i32>} : memref<18x18x128xf32, #tpu.memory_space<vmem>>, vector<18x1x128xf32>,
    %c0_21 = arith.constant 0 : index
    %c1 = arith.constant 1 : index
    %c0_22 = arith.constant 0 : index
    %30 = vector.load %arg10[%c0_21, %c1, %c0_22] : memref<18x18x128xf32, #tpu.memory_space<vmem>>, vector<18x16x128xf32>
    tpu.vector_store %arg10[%c0_21, %c1, %c0_22], %26 {strides = array<i32>} : memref<18x18x128xf32, #tpu.memory_space<vmem>>, vector<18x16x128xf32>,
    %cst_23 = arith.constant 0.000000e+00 : f32
    %31 = vector.broadcast %cst_23 : f32 to vector<1x16x128xf32>
    %c0_i32_24 = arith.constant 0 : i32
    %32 = arith.cmpi eq, %1, %c0_i32_24 : i32
    %33 = arith.extui %32 : i1 to i32
    %c0_i32_25 = arith.constant 0 : i32
    %34 = arith.cmpi ne, %33, %c0_i32_25 : i32
    scf.if %34 {
      %c0_72 = arith.constant 0 : index
      %c1_73 = arith.constant 1 : index
      %c0_74 = arith.constant 0 : index
      %131 = vector.load %arg10[%c0_72, %c1_73, %c0_74] : memref<18x18x128xf32, #tpu.memory_space<vmem>>, vector<1x16x128xf32>
      tpu.vector_store %arg10[%c0_72, %c1_73, %c0_74], %31 {strides = array<i32>} : memref<18x18x128xf32, #tpu.memory_space<vmem>>, vector<1x16x128xf32>,
    } else {
    }
    %c16_i32_26 = arith.constant 16 : i32
    %35 = arith.addi %1, %c16_i32_26 : i32
    %c16_i32_27 = arith.constant 16 : i32
    %36 = arith.cmpi sge, %35, %c16_i32_27 : i32
    %37 = arith.extui %36 : i1 to i32
    %c0_i32_28 = arith.constant 0 : i32
    %38 = arith.cmpi ne, %37, %c0_i32_28 : i32
    scf.if %38 {
      %c17_72 = arith.constant 17 : index
      %c1_73 = arith.constant 1 : index
      %c0_74 = arith.constant 0 : index
      %131 = vector.load %arg10[%c17_72, %c1_73, %c0_74] : memref<18x18x128xf32, #tpu.memory_space<vmem>>, vector<1x16x128xf32>
      tpu.vector_store %arg10[%c17_72, %c1_73, %c0_74], %31 {strides = array<i32>} : memref<18x18x128xf32, #tpu.memory_space<vmem>>, vector<1x16x128xf32>,
    } else {
    }
    %c0_29 = arith.constant 0 : index
    %c0_30 = arith.constant 0 : index
    %39 = vector.load %arg5[%c0_29, %c0_30] : memref<9x128xf32, #tpu.memory_space<vmem>>, vector<9x128xf32>
    %cst_31 = arith.constant 0.000000e+00 : f32
    %40 = vector.broadcast %cst_31 : f32 to vector<16x16x128xf32>
    %c0_32 = arith.constant 0 : index
    %c0_33 = arith.constant 0 : index
    %c0_34 = arith.constant 0 : index
    %41 = vector.load %arg10[%c0_32, %c0_33, %c0_34] : memref<18x18x128xf32, #tpu.memory_space<vmem>>, vector<16x16x128xf32>
    %42 = vector.extract_strided_slice %39 {offsets = [0, 0], sizes = [1, 128], strides = [1, 1]} : vector<9x128xf32> to vector<1x128xf32>
    %43 = vector.shape_cast %42 : vector<1x128xf32> to vector<128xf32>
    %44 = vector.shape_cast %43 : vector<128xf32> to vector<1x1x128xf32>
    %45 = vector.broadcast %44 : vector<1x1x128xf32> to vector<16x16x128xf32>
    %46 = arith.mulf %41, %45 : vector<16x16x128xf32>
    %47 = arith.addf %40, %46 : vector<16x16x128xf32>
    %c0_35 = arith.constant 0 : index
    %c1_36 = arith.constant 1 : index
    %c0_37 = arith.constant 0 : index
    %48 = vector.load %arg10[%c0_35, %c1_36, %c0_37] : memref<18x18x128xf32, #tpu.memory_space<vmem>>, vector<16x16x128xf32>
    %49 = vector.extract_strided_slice %39 {offsets = [1, 0], sizes = [1, 128], strides = [1, 1]} : vector<9x128xf32> to vector<1x128xf32>
    %50 = vector.shape_cast %49 : vector<1x128xf32> to vector<128xf32>
    %51 = vector.shape_cast %50 : vector<128xf32> to vector<1x1x128xf32>
    %52 = vector.broadcast %51 : vector<1x1x128xf32> to vector<16x16x128xf32>
    %53 = arith.mulf %48, %52 : vector<16x16x128xf32>
    %54 = arith.addf %47, %53 : vector<16x16x128xf32>
    %c0_38 = arith.constant 0 : index
    %c2 = arith.constant 2 : index
    %c0_39 = arith.constant 0 : index
    %55 = vector.load %arg10[%c0_38, %c2, %c0_39] : memref<18x18x128xf32, #tpu.memory_space<vmem>>, vector<16x16x128xf32>
    %56 = vector.extract_strided_slice %39 {offsets = [2, 0], sizes = [1, 128], strides = [1, 1]} : vector<9x128xf32> to vector<1x128xf32>
    %57 = vector.shape_cast %56 : vector<1x128xf32> to vector<128xf32>
    %58 = vector.shape_cast %57 : vector<128xf32> to vector<1x1x128xf32>
    %59 = vector.broadcast %58 : vector<1x1x128xf32> to vector<16x16x128xf32>
    %60 = arith.mulf %55, %59 : vector<16x16x128xf32>
    %61 = arith.addf %54, %60 : vector<16x16x128xf32>
    %c1_40 = arith.constant 1 : index
    %c0_41 = arith.constant 0 : index
    %c0_42 = arith.constant 0 : index
    %62 = vector.load %arg10[%c1_40, %c0_41, %c0_42] : memref<18x18x128xf32, #tpu.memory_space<vmem>>, vector<16x16x128xf32>
    %63 = vector.extract_strided_slice %39 {offsets = [3, 0], sizes = [1, 128], strides = [1, 1]} : vector<9x128xf32> to vector<1x128xf32>
    %64 = vector.shape_cast %63 : vector<1x128xf32> to vector<128xf32>
    %65 = vector.shape_cast %64 : vector<128xf32> to vector<1x1x128xf32>
    %66 = vector.broadcast %65 : vector<1x1x128xf32> to vector<16x16x128xf32>
    %67 = arith.mulf %62, %66 : vector<16x16x128xf32>
    %68 = arith.addf %61, %67 : vector<16x16x128xf32>
    %c1_43 = arith.constant 1 : index
    %c1_44 = arith.constant 1 : index
    %c0_45 = arith.constant 0 : index
    %69 = vector.load %arg10[%c1_43, %c1_44, %c0_45] : memref<18x18x128xf32, #tpu.memory_space<vmem>>, vector<16x16x128xf32>
    %70 = vector.extract_strided_slice %39 {offsets = [4, 0], sizes = [1, 128], strides = [1, 1]} : vector<9x128xf32> to vector<1x128xf32>
    %71 = vector.shape_cast %70 : vector<1x128xf32> to vector<128xf32>
    %72 = vector.shape_cast %71 : vector<128xf32> to vector<1x1x128xf32>
    %73 = vector.broadcast %72 : vector<1x1x128xf32> to vector<16x16x128xf32>
    %74 = arith.mulf %69, %73 : vector<16x16x128xf32>
    %75 = arith.addf %68, %74 : vector<16x16x128xf32>
    %c1_46 = arith.constant 1 : index
    %c2_47 = arith.constant 2 : index
    %c0_48 = arith.constant 0 : index
    %76 = vector.load %arg10[%c1_46, %c2_47, %c0_48] : memref<18x18x128xf32, #tpu.memory_space<vmem>>, vector<16x16x128xf32>
    %77 = vector.extract_strided_slice %39 {offsets = [5, 0], sizes = [1, 128], strides = [1, 1]} : vector<9x128xf32> to vector<1x128xf32>
    %78 = vector.shape_cast %77 : vector<1x128xf32> to vector<128xf32>
    %79 = vector.shape_cast %78 : vector<128xf32> to vector<1x1x128xf32>
    %80 = vector.broadcast %79 : vector<1x1x128xf32> to vector<16x16x128xf32>
    %81 = arith.mulf %76, %80 : vector<16x16x128xf32>
    %82 = arith.addf %75, %81 : vector<16x16x128xf32>
    %c2_49 = arith.constant 2 : index
    %c0_50 = arith.constant 0 : index
    %c0_51 = arith.constant 0 : index
    %83 = vector.load %arg10[%c2_49, %c0_50, %c0_51] : memref<18x18x128xf32, #tpu.memory_space<vmem>>, vector<16x16x128xf32>
    %84 = vector.extract_strided_slice %39 {offsets = [6, 0], sizes = [1, 128], strides = [1, 1]} : vector<9x128xf32> to vector<1x128xf32>
    %85 = vector.shape_cast %84 : vector<1x128xf32> to vector<128xf32>
    %86 = vector.shape_cast %85 : vector<128xf32> to vector<1x1x128xf32>
    %87 = vector.broadcast %86 : vector<1x1x128xf32> to vector<16x16x128xf32>
    %88 = arith.mulf %83, %87 : vector<16x16x128xf32>
    %89 = arith.addf %82, %88 : vector<16x16x128xf32>
    %c2_52 = arith.constant 2 : index
    %c1_53 = arith.constant 1 : index
    %c0_54 = arith.constant 0 : index
    %90 = vector.load %arg10[%c2_52, %c1_53, %c0_54] : memref<18x18x128xf32, #tpu.memory_space<vmem>>, vector<16x16x128xf32>
    %91 = vector.extract_strided_slice %39 {offsets = [7, 0], sizes = [1, 128], strides = [1, 1]} : vector<9x128xf32> to vector<1x128xf32>
    %92 = vector.shape_cast %91 : vector<1x128xf32> to vector<128xf32>
    %93 = vector.shape_cast %92 : vector<128xf32> to vector<1x1x128xf32>
    %94 = vector.broadcast %93 : vector<1x1x128xf32> to vector<16x16x128xf32>
    %95 = arith.mulf %90, %94 : vector<16x16x128xf32>
    %96 = arith.addf %89, %95 : vector<16x16x128xf32>
    %c2_55 = arith.constant 2 : index
    %c2_56 = arith.constant 2 : index
    %c0_57 = arith.constant 0 : index
    %97 = vector.load %arg10[%c2_55, %c2_56, %c0_57] : memref<18x18x128xf32, #tpu.memory_space<vmem>>, vector<16x16x128xf32>
    %98 = vector.extract_strided_slice %39 {offsets = [8, 0], sizes = [1, 128], strides = [1, 1]} : vector<9x128xf32> to vector<1x128xf32>
    %99 = vector.shape_cast %98 : vector<1x128xf32> to vector<128xf32>
    %100 = vector.shape_cast %99 : vector<128xf32> to vector<1x1x128xf32>
    %101 = vector.broadcast %100 : vector<1x1x128xf32> to vector<16x16x128xf32>
    %102 = arith.mulf %97, %101 : vector<16x16x128xf32>
    %103 = arith.addf %96, %102 : vector<16x16x128xf32>
    %c0_58 = arith.constant 0 : index
    %c0_59 = arith.constant 0 : index
    %104 = vector.load %arg6[%c0_58, %c0_59] : memref<1x128xf32, #tpu.memory_space<vmem>>, vector<1x128xf32>
    %105 = vector.shape_cast %104 : vector<1x128xf32> to vector<128xf32>
    %106 = vector.shape_cast %105 : vector<128xf32> to vector<1x1x128xf32>
    %107 = vector.broadcast %106 : vector<1x1x128xf32> to vector<16x16x128xf32>
    %108 = arith.addf %103, %107 : vector<16x16x128xf32>
    %cst_60 = arith.constant 0.000000e+00 : f32
    %109 = vector.broadcast %cst_60 : f32 to vector<16x16x128xf32>
    %110 = arith.maximumf %108, %109 : vector<16x16x128xf32>
    %cst_61 = arith.constant 6.000000e+00 : f32
    %111 = vector.broadcast %cst_61 : f32 to vector<16x16x128xf32>
    %112 = arith.minimumf %110, %111 : vector<16x16x128xf32>
    %113 = vector.shape_cast %112 : vector<16x16x128xf32> to vector<256x128xf32>
    %c0_62 = arith.constant 0 : index
    %c0_63 = arith.constant 0 : index
    %114 = vector.load %arg7[%c0_62, %c0_63] : memref<128x128xf32, #tpu.memory_space<vmem>>, vector<128x128xf32>
    %cst_64 = arith.constant dense<0.000000e+00> : vector<256x128xf32>
    %115 = tpu.matmul %113, %114, %cst_64 {dimension_numbers = #tpu.dot_dimension_numbers<[1], [0], [0], [1], [0, 0, 1, 1], [], []>} : vector<256x128xf32>, vector<128x128xf32>, vector<256x128xf32> -> vector<256x128xf32>
    %c0_65 = arith.constant 0 : index
    %c0_66 = arith.constant 0 : index
    %116 = vector.load %arg8[%c0_65, %c0_66] : memref<1x128xf32, #tpu.memory_space<vmem>>, vector<1x128xf32>
    %117 = vector.broadcast %116 : vector<1x128xf32> to vector<256x128xf32>
    %118 = arith.addf %115, %117 : vector<256x128xf32>
    %119 = tpu.iota {dimensions = array<i32: 0>} : vector<4x128xi32>
    %120 = tpu.iota {dimensions = array<i32: 1>} : vector<4x128xi32>
    %121 = arith.cmpi eq, %119, %120 : vector<4x128xi32>
    %122 = arith.extui %121 : vector<4x128xi1> to vector<4x128xi32>
    %123 = arith.sitofp %122 : vector<4x128xi32> to vector<4x128xf32>
    %124 = vector.shape_cast %4 : vector<16x16x4xf32> to vector<256x4xf32>
    %cst_67 = arith.constant dense<0.000000e+00> : vector<256x128xf32>
    %125 = tpu.matmul %124, %123, %cst_67 {dimension_numbers = #tpu.dot_dimension_numbers<[1], [0], [0], [1], [0, 0, 1, 1], [], []>} : vector<256x4xf32>, vector<4x128xf32>, vector<256x128xf32> -> vector<256x128xf32>
    %126 = arith.addf %118, %125 : vector<256x128xf32>
    %127 = vector.shape_cast %126 : vector<256x128xf32> to vector<16x16x128xf32>
    %c0_68 = arith.constant 0 : index
    %c0_69 = arith.constant 0 : index
    %c0_70 = arith.constant 0 : index
    %c0_71 = arith.constant 0 : index
    %128 = vector.load %arg9[%c0_68, %c0_69, %c0_70, %c0_71] : memref<1x16x16x128xf32, #tpu.memory_space<vmem>>, vector<1x16x16x128xf32>
    %129 = vector.shape_cast %128 : vector<1x16x16x128xf32> to vector<16x16x128xf32>
    %130 = vector.shape_cast %127 : vector<16x16x128xf32> to vector<1x16x16x128xf32>
    tpu.vector_store %arg9[%c0_68, %c0_69, %c0_70, %c0_71], %130 {strides = array<i32>} : memref<1x16x16x128xf32, #tpu.memory_space<vmem>>, vector<1x16x16x128xf32>,
    return
  }
  func.func @transform_0(%arg0: i32, %arg1: i32) -> (i32, i32, i32, i32) {
    %c0_i32 = arith.constant 0 : i32
    %c0_i32_0 = arith.constant 0 : i32
    %c0_i32_1 = arith.constant 0 : i32
    %c0_i32_2 = arith.constant 0 : i32
    return %arg0, %c0_i32, %c0_i32_0, %c0_i32_1 : i32, i32, i32, i32
  }
  func.func @transform_1(%arg0: i32, %arg1: i32) -> (i32, i32) {
    %c0_i32 = arith.constant 0 : i32
    %c0_i32_0 = arith.constant 0 : i32
    %c0_i32_1 = arith.constant 0 : i32
    return %c0_i32, %c0_i32_0 : i32, i32
  }
  func.func @transform_2(%arg0: i32, %arg1: i32) -> (i32, i32) {
    %c0_i32 = arith.constant 0 : i32
    %c0_i32_0 = arith.constant 0 : i32
    %c0_i32_1 = arith.constant 0 : i32
    return %c0_i32, %c0_i32_0 : i32, i32
  }
  func.func @transform_3(%arg0: i32, %arg1: i32) -> (i32, i32) {
    %c0_i32 = arith.constant 0 : i32
    %c0_i32_0 = arith.constant 0 : i32
    %c0_i32_1 = arith.constant 0 : i32
    return %c0_i32, %c0_i32_0 : i32, i32
  }
  func.func @transform_4(%arg0: i32, %arg1: i32) -> (i32, i32) {
    %c0_i32 = arith.constant 0 : i32
    %c0_i32_0 = arith.constant 0 : i32
    %c0_i32_1 = arith.constant 0 : i32
    return %c0_i32, %c0_i32_0 : i32, i32
  }
  func.func @transform_5(%arg0: i32, %arg1: i32) -> (i32, i32) {
    %c0_i32 = arith.constant 0 : i32
    %c0_i32_0 = arith.constant 0 : i32
    %c0_i32_1 = arith.constant 0 : i32
    return %c0_i32, %c0_i32_0 : i32, i32
  }
  func.func @transform_6(%arg0: i32, %arg1: i32) -> (i32, i32) {
    %c0_i32 = arith.constant 0 : i32
    %c0_i32_0 = arith.constant 0 : i32
    %c0_i32_1 = arith.constant 0 : i32
    return %c0_i32, %c0_i32_0 : i32, i32
  }
  func.func @transform_7(%arg0: i32, %arg1: i32) -> (i32, i32, i32, i32) {
    %c0_i32 = arith.constant 0 : i32
    %c0_i32_0 = arith.constant 0 : i32
    %c0_i32_1 = arith.constant 0 : i32
    return %arg0, %arg1, %c0_i32, %c0_i32_0 : i32, i32, i32, i32
  }
}

</mosaic_0001>

<llo_original>
// kernel: inverted_residual_bottleneck.1
$region0: #{inverted_residual_bottleneck.1}
  #allocation0 [shape = 'u32[]', space=smem, size = 0x4, offset = 0x4, fixed_abs, tag = 'smem constant byte address 0x4 - core index']
  #allocation1 [shape = 'u32[72,128]{1,0:T(1,128)}', space=vmem, size = 0x9000, scoped, tag = 'internal scratch']
  #allocation2 [shape = 'f32[18,18,128]{2,1,0:T(8,128)}', space=vmem, size = 0x36000, scoped, tag = 'scratch operand']
  %s0 = inlined_call_operand.vmem [shape: f32[2,16,16,4], index: 0, kind: input, shape index: {}]
  %s1 = inlined_call_operand.vmem [shape: f32[4,128], index: 1, kind: input, shape index: {}]
  %s2 = inlined_call_operand.vmem [shape: f32[1,128], index: 2, kind: input, shape index: {}]
  %s3 = inlined_call_operand.vmem [shape: f32[9,128], index: 3, kind: input, shape index: {}]
  %s4 = inlined_call_operand.vmem [shape: f32[1,128], index: 4, kind: input, shape index: {}]
  %s5 = inlined_call_operand.vmem [shape: f32[128,128], index: 5, kind: input, shape index: {}]
  %s6 = inlined_call_operand.vmem [shape: f32[1,128], index: 6, kind: input, shape index: {}]
  %s7 = inlined_call_operand.vmem [shape: f32[2,16,16,128], index: 7, kind: output, shape index: {}]
  %s8 = sld [smem:[#allocation0]]
  $region69: #{inverted_residual_bottleneck.1} parent=0
    _
  %s10 = ssub.s32 1, %s8
  %s11 = scalar_select 0, %s10, %s8
  loop: start=0, step=1, limit=4
  $region2: #{inverted_residual_bottleneck.1} parent=0 // loop_pre_header
    _
  $region3: #{inverted_residual_bottleneck.1} parent=0 // loop_header
    %s13 = sphi 0, %s17
    %p14 = scmp.ge.s32.totalorder %s13, 4
    %s20 = sphi 0, %s32
    %s21 = sphi 0, %s28
    %s22 = sphi 0, %s20
    %s23 = sphi 0, %s21
    %s24 = sphi 0, %s22
    %s25 = sphi 0, %s23
    %s35 = sphi 0, %s37
    %s38 = sphi 0, %s35
    %s39 = sphi 0, %s38
    %s55 = sphi 0, %s39
    %s59 = sphi 0, %s59
    %s61 = sphi 0, %s59
    %s62 = sphi 0, %s61
    %s76 = sphi 0, %s62
    %s80 = sphi 0, %s80
    %s82 = sphi 0, %s80
    %s83 = sphi 0, %s82
    %s97 = sphi 0, %s83
    %s101 = sphi 0, %s101
    %s103 = sphi 0, %s101
    %s104 = sphi 0, %s103
    %s118 = sphi 0, %s104
    %s122 = sphi 0, %s122
    %s124 = sphi 0, %s122
    %s125 = sphi 0, %s124
    %s139 = sphi 0, %s125
    %s143 = sphi 0, %s143
    %s145 = sphi 0, %s143
    %s146 = sphi 0, %s145
    %s160 = sphi 0, %s146
    %s164 = sphi 0, %s164
    %s166 = sphi 0, %s164
    %s167 = sphi 0, %s166
    %s181 = sphi 0, %s167
    %s189 = sphi 0, %s191
    %s192 = sphi 0, %s189
    %s193 = sphi 0, %s192
    %s209 = sphi 0, %s193
  $region4: #{inverted_residual_bottleneck.1} parent=0 // loop_header_branch
    %16 = sbr.rel (%p14) target = $region8
  $region5: #{inverted_residual_bottleneck.1} parent=0 // loop_body
    %s18 = ssub.s32 %s13, 1
    %s19 = ssub.s32 %s13, 2
    %s26 = sadd.s32 1, %s21
    %p27 = scmp.ge.s32.totalorder %s26, 1
    %s28 = scalar_select %p27, 0, %s26
    %s29 = sadd.s32 1, %s20
    %s30 = scalar_select %p27, %s29, %s20
    %p31 = scmp.ge.s32.totalorder %s30, 2
    %s32 = scalar_select %p31, 0, %s30
    %s33 = ssub.s32 %s20, %s32
    %p34 = scmp.eq.s32.totalorder %s33, 0
    %s36 = sadd.s32 %s35, 1
    %s37 = scalar_select %p34, %s35, %s36
    %p40 = pneg %p34
    %p41 = scmp.eq.s32.totalorder %s13, 1
    %p42 = por %p40, %p41
    %p43 = scmp.ne.s32.totalorder %s35, %s38
    %p44 = scmp.eq.s32.totalorder %s13, 0
    %p45 = por %p43, %p44
    %p46 = scmp.ne.s32.totalorder %s35, %s38
    %p47 = scmp.eq.s32.totalorder %s18, 1
    %p48 = por %p46, %p47
    %p49 = scmp.ne.s32.totalorder %s38, %s39
    %p50 = scmp.eq.s32.totalorder %s18, 0
    %p51 = por %p49, %p50
    %p52 = scmp.ne.s32.totalorder %s38, %s39
    %p53 = scmp.eq.s32.totalorder %s19, 1
    %p54 = por %p52, %p53
    %p56 = scmp.ne.s32.totalorder %s39, %s55
    %p57 = scmp.eq.s32.totalorder %s19, 0
    %p58 = por %p56, %p57
    %s60 = sadd.s32 %s59, 1
    %p63 = scmp.eq.s32.totalorder %s13, 1
    %p64 = scmp.ne.s32.totalorder %s59, %s61
    %p65 = scmp.eq.s32.totalorder %s13, 0
    %p66 = por %p64, %p65
    %p67 = scmp.ne.s32.totalorder %s59, %s61
    %p68 = scmp.eq.s32.totalorder %s18, 1
    %p69 = por %p67, %p68
    %p70 = scmp.ne.s32.totalorder %s61, %s62
    %p71 = scmp.eq.s32.totalorder %s18, 0
    %p72 = por %p70, %p71
    %p73 = scmp.ne.s32.totalorder %s61, %s62
    %p74 = scmp.eq.s32.totalorder %s19, 1
    %p75 = por %p73, %p74
    %p77 = scmp.ne.s32.totalorder %s62, %s76
    %p78 = scmp.eq.s32.totalorder %s19, 0
    %p79 = por %p77, %p78
    %s81 = sadd.s32 %s80, 1
    %p84 = scmp.eq.s32.totalorder %s13, 1
    %p85 = scmp.ne.s32.totalorder %s80, %s82
    %p86 = scmp.eq.s32.totalorder %s13, 0
    %p87 = por %p85, %p86
    %p88 = scmp.ne.s32.totalorder %s80, %s82
    %p89 = scmp.eq.s32.totalorder %s18, 1
    %p90 = por %p88, %p89
    %p91 = scmp.ne.s32.totalorder %s82, %s83
    %p92 = scmp.eq.s32.totalorder %s18, 0
    %p93 = por %p91, %p92
    %p94 = scmp.ne.s32.totalorder %s82, %s83
    %p95 = scmp.eq.s32.totalorder %s19, 1
    %p96 = por %p94, %p95
    %p98 = scmp.ne.s32.totalorder %s83, %s97
    %p99 = scmp.eq.s32.totalorder %s19, 0
    %p100 = por %p98, %p99
    %s102 = sadd.s32 %s101, 1
    %p105 = scmp.eq.s32.totalorder %s13, 1
    %p106 = scmp.ne.s32.totalorder %s101, %s103
    %p107 = scmp.eq.s32.totalorder %s13, 0
    %p108 = por %p106, %p107
    %p109 = scmp.ne.s32.totalorder %s101, %s103
    %p110 = scmp.eq.s32.totalorder %s18, 1
    %p111 = por %p109, %p110
    %p112 = scmp.ne.s32.totalorder %s103, %s104
    %p113 = scmp.eq.s32.totalorder %s18, 0
    %p114 = por %p112, %p113
    %p115 = scmp.ne.s32.totalorder %s103, %s104
    %p116 = scmp.eq.s32.totalorder %s19, 1
    %p117 = por %p115, %p116
    %p119 = scmp.ne.s32.totalorder %s104, %s118
    %p120 = scmp.eq.s32.totalorder %s19, 0
    %p121 = por %p119, %p120
    %s123 = sadd.s32 %s122, 1
    %p126 = scmp.eq.s32.totalorder %s13, 1
    %p127 = scmp.ne.s32.totalorder %s122, %s124
    %p128 = scmp.eq.s32.totalorder %s13, 0
    %p129 = por %p127, %p128
    %p130 = scmp.ne.s32.totalorder %s122, %s124
    %p131 = scmp.eq.s32.totalorder %s18, 1
    %p132 = por %p130, %p131
    %p133 = scmp.ne.s32.totalorder %s124, %s125
    %p134 = scmp.eq.s32.totalorder %s18, 0
    %p135 = por %p133, %p134
    %p136 = scmp.ne.s32.totalorder %s124, %s125
    %p137 = scmp.eq.s32.totalorder %s19, 1
    %p138 = por %p136, %p137
    %p140 = scmp.ne.s32.totalorder %s125, %s139
    %p141 = scmp.eq.s32.totalorder %s19, 0
    %p142 = por %p140, %p141
    %s144 = sadd.s32 %s143, 1
    %p147 = scmp.eq.s32.totalorder %s13, 1
    %p148 = scmp.ne.s32.totalorder %s143, %s145
    %p149 = scmp.eq.s32.totalorder %s13, 0
    %p150 = por %p148, %p149
    %p151 = scmp.ne.s32.totalorder %s143, %s145
    %p152 = scmp.eq.s32.totalorder %s18, 1
    %p153 = por %p151, %p152
    %p154 = scmp.ne.s32.totalorder %s145, %s146
    %p155 = scmp.eq.s32.totalorder %s18, 0
    %p156 = por %p154, %p155
    %p157 = scmp.ne.s32.totalorder %s145, %s146
    %p158 = scmp.eq.s32.totalorder %s19, 1
    %p159 = por %p157, %p158
    %p161 = scmp.ne.s32.totalorder %s146, %s160
    %p162 = scmp.eq.s32.totalorder %s19, 0
    %p163 = por %p161, %p162
    %s165 = sadd.s32 %s164, 1
    %p168 = scmp.eq.s32.totalorder %s13, 1
    %p169 = scmp.ne.s32.totalorder %s164, %s166
    %p170 = scmp.eq.s32.totalorder %s13, 0
    %p171 = por %p169, %p170
    %p172 = scmp.ne.s32.totalorder %s164, %s166
    %p173 = scmp.eq.s32.totalorder %s18, 1
    %p174 = por %p172, %p173
    %p175 = scmp.ne.s32.totalorder %s166, %s167
    %p176 = scmp.eq.s32.totalorder %s18, 0
    %p177 = por %p175, %p176
    %p178 = scmp.ne.s32.totalorder %s166, %s167
    %p179 = scmp.eq.s32.totalorder %s19, 1
    %p180 = por %p178, %p179
    %p182 = scmp.ne.s32.totalorder %s167, %s181
    %p183 = scmp.eq.s32.totalorder %s19, 0
    %p184 = por %p182, %p183
    %s185 = ssub.s32 %s20, %s32
    %s186 = ssub.s32 %s21, %s28
    %s187 = sor.u32 %s185, %s186
    %p188 = scmp.eq.s32.totalorder %s187, 0
    %s190 = sadd.s32 %s189, 1
    %s191 = scalar_select %p188, %s189, %s190
    %p194 = pneg %p188
    %p195 = scmp.eq.s32.totalorder %s13, 1
    %p196 = por %p194, %p195
    %p197 = scmp.ne.s32.totalorder %s189, %s192
    %p198 = scmp.eq.s32.totalorder %s13, 0
    %p199 = por %p197, %p198
    %p200 = scmp.ne.s32.totalorder %s189, %s192
    %p201 = scmp.eq.s32.totalorder %s18, 1
    %p202 = por %p200, %p201
    %p203 = scmp.ne.s32.totalorder %s192, %s193
    %p204 = scmp.eq.s32.totalorder %s18, 0
    %p205 = por %p203, %p204
    %p206 = scmp.ne.s32.totalorder %s192, %s193
    %p207 = scmp.eq.s32.totalorder %s19, 1
    %p208 = por %p206, %p207
    %p210 = scmp.ne.s32.totalorder %s193, %s209
    %p211 = scmp.eq.s32.totalorder %s19, 0
    %p212 = por %p210, %p211
    %p213 = scmp.le.s32.totalorder 1, %s13
    %p214 = scmp.lt.s32.totalorder %s13, 3
    %p215 = pnand %p213, %p214
    %p216 = pneg %p215
    // Predicated region
    $region9: #{inverted_residual_bottleneck.1} parent=5 // pred_check
      _
    $region10: #{inverted_residual_bottleneck.1} parent=5 // pred_check_branch
      %218 = sbr.rel (%p215) target = $region12
    $region11: #{inverted_residual_bottleneck.1} parent=5 // pred_region
      %s219 = ssub.s32 %s13, 1
      // Predicated region
      $region13: #{inverted_residual_bottleneck.1} parent=11 // pred_check
        %p220 = pneg %p72
      $region14: #{inverted_residual_bottleneck.1} parent=11 // pred_check_branch
        %222 = sbr.rel (%p220) target = $region16
      $region15: #{inverted_residual_bottleneck.1} parent=11 // pred_region
        _
      $region16: #{inverted_residual_bottleneck.1} parent=11 // pred_fallthru
        _
      // Predicated region
      $region17: #{inverted_residual_bottleneck.1} parent=11 // pred_check
        %p223 = pneg %p93
      $region18: #{inverted_residual_bottleneck.1} parent=11 // pred_check_branch
        %225 = sbr.rel (%p223) target = $region20
      $region19: #{inverted_residual_bottleneck.1} parent=11 // pred_region
        _
      $region20: #{inverted_residual_bottleneck.1} parent=11 // pred_fallthru
        _
      // Predicated region
      $region21: #{inverted_residual_bottleneck.1} parent=11 // pred_check
        %p226 = pneg %p114
      $region22: #{inverted_residual_bottleneck.1} parent=11 // pred_check_branch
        %228 = sbr.rel (%p226) target = $region24
      $region23: #{inverted_residual_bottleneck.1} parent=11 // pred_region
        _
      $region24: #{inverted_residual_bottleneck.1} parent=11 // pred_fallthru
        _
      // Predicated region
      $region25: #{inverted_residual_bottleneck.1} parent=11 // pred_check
        %p229 = pneg %p135
      $region26: #{inverted_residual_bottleneck.1} parent=11 // pred_check_branch
        %231 = sbr.rel (%p229) target = $region28
      $region27: #{inverted_residual_bottleneck.1} parent=11 // pred_region
        _
      $region28: #{inverted_residual_bottleneck.1} parent=11 // pred_fallthru
        _
      // Predicated region
      $region29: #{inverted_residual_bottleneck.1} parent=11 // pred_check
        %p232 = pneg %p156
      $region30: #{inverted_residual_bottleneck.1} parent=11 // pred_check_branch
        %234 = sbr.rel (%p232) target = $region32
      $region31: #{inverted_residual_bottleneck.1} parent=11 // pred_region
        _
      $region32: #{inverted_residual_bottleneck.1} parent=11 // pred_fallthru
        _
      // Predicated region
      $region33: #{inverted_residual_bottleneck.1} parent=11 // pred_check
        %p235 = pneg %p177
      $region34: #{inverted_residual_bottleneck.1} parent=11 // pred_check_branch
        %237 = sbr.rel (%p235) target = $region36
      $region35: #{inverted_residual_bottleneck.1} parent=11 // pred_region
        _
      $region36: #{inverted_residual_bottleneck.1} parent=11 // pred_fallthru
        _
    $region12: #{inverted_residual_bottleneck.1} parent=5 // pred_fallthru
      _
    %p238 = scmp.lt.s32.totalorder %s13, 2
    // Predicated region
    $region37: #{inverted_residual_bottleneck.1} parent=5 // pred_check
      %p239 = pneg %p238
    $region38: #{inverted_residual_bottleneck.1} parent=5 // pred_check_branch
      %241 = sbr.rel (%p239) target = $region40
    $region39: #{inverted_residual_bottleneck.1} parent=5 // pred_region
      // Predicated region
      $region41: #{inverted_residual_bottleneck.1} parent=39 // pred_check
        %p242 = pneg %p45
      $region42: #{inverted_residual_bottleneck.1} parent=39 // pred_check_branch
        %244 = sbr.rel (%p242) target = $region44
      $region43: #{inverted_residual_bottleneck.1} parent=39 // pred_region
        %p245 = scmp.lt.s32.totalorder %s20, 1
        %s246 = scalar_select %p245, %s20, 1
        %s247 = smul.addr %s246, 32
        %s248 = smul.addr %s247, 8
        %s249 = scalar_lea.vmem %s0, %s248
      $region44: #{inverted_residual_bottleneck.1} parent=39 // pred_fallthru
        _
    $region40: #{inverted_residual_bottleneck.1} parent=5 // pred_fallthru
      _
    %p250 = scmp.le.s32.totalorder 1, %s13
    %p251 = scmp.lt.s32.totalorder %s13, 3
    %p252 = pnand %p250, %p251
    %p253 = pneg %p252
    // Predicated region
    $region45: #{inverted_residual_bottleneck.1} parent=5 // pred_check
      _
    $region46: #{inverted_residual_bottleneck.1} parent=5 // pred_check_branch
      %255 = sbr.rel (%p252) target = $region48
    $region47: #{inverted_residual_bottleneck.1} parent=5 // pred_region
      %s256 = ssub.s32 %s13, 1
      %p257 = scmp.lt.s32.totalorder %s22, 1
      %s258 = scalar_select %p257, %s22, 1
      %s259 = smul.addr %s258, 32
      %s260 = smul.addr %s259, 8
      %s261 = scalar_lea.vmem %s0, %s260
      %p262 = pneg %p51
      %p263 = pneg %p48
      %p264 = pneg %p72
      %p265 = pneg %p69
      %p266 = pneg %p93
      %p267 = pneg %p90
      %p268 = pneg %p114
      %p269 = pneg %p111
      %p270 = pneg %p135
      %p271 = pneg %p132
      %p272 = pneg %p156
      %p273 = pneg %p153
      %p274 = pneg %p177
      %p275 = pneg %p174
      %p276 = pneg %p205
      %p277 = pneg %p202
      %s278 = smul.u32 16, %s23
      %p279 = scmp.lt.s32.totalorder %s22, 1
      %s280 = scalar_select %p279, %s22, 1
      %p281 = scmp.lt.s32.totalorder %s278, 15
      %s282 = scalar_select %p281, %s278, 15
      %s283 = smul.addr %s282, 2
      %s284 = smul.addr %s280, 32
      %s285 = sadd.s32 %s283, %s284
      %s286 = smul.addr %s285, 8
      %s287 = scalar_lea.vmem %s7, %s286
      %p288 = scmp.lt.s32.totalorder %s22, 1
      %s289 = scalar_select %p288, %s22, 1
      %s290 = smul.addr %s289, 32
      %s291 = smul.addr %s290, 8
      %s292 = scalar_lea.vmem %s0, %s291
      %s293 = smul.u32 16, %s23
      %p294 = scmp.lt.s32.totalorder %s22, 1
      %s295 = scalar_select %p294, %s22, 1
      %p296 = scmp.lt.s32.totalorder %s293, 15
      %s297 = scalar_select %p296, %s293, 15
      %s298 = smul.addr %s297, 2
      %s299 = smul.addr %s295, 32
      %s300 = sadd.s32 %s298, %s299
      %s301 = smul.addr %s300, 8
      %s302 = scalar_lea.vmem %s7, %s301
      %s303 = smul.u32 16, %s23
      %s304 = smul.u32 %s23, 16
      %s305 = smul.u32 %s304, 16
      %s306 = scalar_lea.vmem %s292, %s305
      %v307 = vld [vmem:[%s306] sm:$0xff]
      %v308 = vld [vmem:[%s306 + $0x8] sm:$0xff]
      %v309 = vld [vmem:[%s306 + $0x10] sm:$0xff]
      %v310 = vld [vmem:[%s306 + $0x18] sm:$0xff]
      %v311 = vld [vmem:[%s306 + $0x20] sm:$0xff]
      %v312 = vld [vmem:[%s306 + $0x28] sm:$0xff]
      %v313 = vld [vmem:[%s306 + $0x30] sm:$0xff]
      %v314 = vld [vmem:[%s306 + $0x38] sm:$0xff]
      %v315 = vld [vmem:[%s306 + $0x40] sm:$0xff]
      %v316 = vld [vmem:[%s306 + $0x48] sm:$0xff]
      %v317 = vld [vmem:[%s306 + $0x50] sm:$0xff]
      %v318 = vld [vmem:[%s306 + $0x58] sm:$0xff]
      %v319 = vld [vmem:[%s306 + $0x60] sm:$0xff]
      %v320 = vld [vmem:[%s306 + $0x68] sm:$0xff]
      %v321 = vld [vmem:[%s306 + $0x70] sm:$0xff]
      %v322 = vld [vmem:[%s306 + $0x78] sm:$0xff]
      %v323 = vld [vmem:[%s306 + $0x80] sm:$0xff]
      %v324 = vld [vmem:[%s306 + $0x88] sm:$0xff]
      %v325 = vld [vmem:[%s306 + $0x90] sm:$0xff]
      %v326 = vld [vmem:[%s306 + $0x98] sm:$0xff]
      %v327 = vld [vmem:[%s306 + $0xa0] sm:$0xff]
      %v328 = vld [vmem:[%s306 + $0xa8] sm:$0xff]
      %v329 = vld [vmem:[%s306 + $0xb0] sm:$0xff]
      %v330 = vld [vmem:[%s306 + $0xb8] sm:$0xff]
      %v331 = vld [vmem:[%s306 + $0xc0] sm:$0xff]
      %v332 = vld [vmem:[%s306 + $0xc8] sm:$0xff]
      %v333 = vld [vmem:[%s306 + $0xd0] sm:$0xff]
      %v334 = vld [vmem:[%s306 + $0xd8] sm:$0xff]
      %v335 = vld [vmem:[%s306 + $0xe0] sm:$0xff]
      %v336 = vld [vmem:[%s306 + $0xe8] sm:$0xff]
      %v337 = vld [vmem:[%s306 + $0xf0] sm:$0xff]
      %v338 = vld [vmem:[%s306 + $0xf8] sm:$0xff]
      %s339 = ssub.s32 %s304, 1
      %p340 = scmp.gt.s32.totalorder %s339, 0
      %s341 = scalar_select %p340, %s339, 0
      %s342 = smul.u32 %s341, 16
      %s343 = scalar_lea.vmem %s292, %s342
      %v344 = vld [vmem:[%s343] sm:$0xff]
      %v345 = vld [vmem:[%s343 + $0x8] sm:$0xff]
      %s346 = sadd.s32 %s304, 16
      %p347 = scmp.lt.s32.totalorder %s346, 15
      %s348 = scalar_select %p347, %s346, 15
      %s349 = smul.u32 %s348, 16
      %s350 = scalar_lea.vmem %s292, %s349
      %v351 = vld [vmem:[%s350] sm:$0xff]
      %v352 = vld [vmem:[%s350 + $0x8] sm:$0xff]
      %v353 = vld [vmem:[%s1] sm:$0xf]
      %v354 = vld [vmem:[%s2] sm:$0x1]
      %v356 = vperm.slane %v354, 0
      %vm358 = vcmask 31744
      %v360 = vsel %vm358, %v344, 0
      %v363 = vsel %vm358, %v345, 0
      %v366 = vsel %vm358, %v307, 0
      %v369 = vsel %vm358, %v308, 0
      %v372 = vsel %vm358, %v309, 0
      %v375 = vsel %vm358, %v310, 0
      %v378 = vsel %vm358, %v311, 0
      %v381 = vsel %vm358, %v312, 0
      %v384 = vsel %vm358, %v313, 0
      %v387 = vsel %vm358, %v314, 0
      %v390 = vsel %vm358, %v315, 0
      %v393 = vsel %vm358, %v316, 0
      %v396 = vsel %vm358, %v317, 0
      %v399 = vsel %vm358, %v318, 0
      %v402 = vsel %vm358, %v319, 0
      %v405 = vsel %vm358, %v320, 0
      %v408 = vsel %vm358, %v321, 0
      %v411 = vsel %vm358, %v322, 0
      %v414 = vsel %vm358, %v323, 0
      %v417 = vsel %vm358, %v324, 0
      %v420 = vsel %vm358, %v325, 0
      %v423 = vsel %vm358, %v326, 0
      %v426 = vsel %vm358, %v327, 0
      %v429 = vsel %vm358, %v328, 0
      %v432 = vsel %vm358, %v329, 0
      %v435 = vsel %vm358, %v330, 0
      %v438 = vsel %vm358, %v331, 0
      %v441 = vsel %vm358, %v332, 0
      %v444 = vsel %vm358, %v333, 0
      %v447 = vsel %vm358, %v334, 0
      %v450 = vsel %vm358, %v335, 0
      %v453 = vsel %vm358, %v336, 0
      %v456 = vsel %vm358, %v337, 0
      %v459 = vsel %vm358, %v338, 0
      %v462 = vsel %vm358, %v351, 0
      %v465 = vsel %vm358, %v352, 0
      %vm467 = vcmask 1043456
      %v469 = vsel %vm467, %v353, 0
      %471 = vmatpush.msra.mxu0 0.0
      %472 = vmatpush.msra.mxu0 0.0
      %473 = vmatpush.msra.mxu0 0.0
      %474 = vmatpush.msra.mxu0 0.0
      %475 = vmatpush.msra.mxu0 0.0
      %476 = vmatpush.msra.mxu0 0.0
      %477 = vmatpush.msra.mxu0 0.0
      %478 = vmatpush.msra.mxu0 0.0
      %479 = vmatpush.msra.mxu0 0.0
      %480 = vmatpush.msra.mxu0 0.0
      %481 = vmatpush.msra.mxu0 0.0
      %482 = vmatpush.msra.mxu0 0.0
      %483 = vmatpush.msra.mxu0 0.0
      %484 = vmatpush.msra.mxu0 0.0
      %485 = vmatpush.msra.mxu0 0.0
      %486 = vmatpush.msra.mxu0 %v469
      %487 = vmatmul.f32.gmra.mxu0 %v360
      %v488 = vpop.f32.mrf.mxu0
      %v489 = vadd.f32 %v356, %v488
      %490 = vmatmul.f32.gmra.mxu0 %v363
      %v491 = vpop.f32.mrf.mxu0
      %v492 = vadd.f32 %v356, %v491
      %493 = vmatmul.f32.gmra.mxu0 %v366
      %v494 = vpop.f32.mrf.mxu0
      %v495 = vadd.f32 %v356, %v494
      %496 = vmatmul.f32.gmra.mxu0 %v369
      %v497 = vpop.f32.mrf.mxu0
      %v498 = vadd.f32 %v356, %v497
      %499 = vmatmul.f32.gmra.mxu0 %v372
      %v500 = vpop.f32.mrf.mxu0
      %v501 = vadd.f32 %v356, %v500
      %502 = vmatmul.f32.gmra.mxu0 %v375
      %v503 = vpop.f32.mrf.mxu0
      %v504 = vadd.f32 %v356, %v503
      %505 = vmatmul.f32.gmra.mxu0 %v378
      %v506 = vpop.f32.mrf.mxu0
      %v507 = vadd.f32 %v356, %v506
      %508 = vmatmul.f32.gmra.mxu0 %v381
      %v509 = vpop.f32.mrf.mxu0
      %v510 = vadd.f32 %v356, %v509
      %511 = vmatmul.f32.gmra.mxu0 %v384
      %v512 = vpop.f32.mrf.mxu0
      %v513 = vadd.f32 %v356, %v512
      %514 = vmatmul.f32.gmra.mxu0 %v387
      %v515 = vpop.f32.mrf.mxu0
      %v516 = vadd.f32 %v356, %v515
      %517 = vmatmul.f32.gmra.mxu0 %v390
      %v518 = vpop.f32.mrf.mxu0
      %v519 = vadd.f32 %v356, %v518
      %520 = vmatmul.f32.gmra.mxu0 %v393
      %v521 = vpop.f32.mrf.mxu0
      %v522 = vadd.f32 %v356, %v521
      %523 = vmatmul.f32.gmra.mxu0 %v396
      %v524 = vpop.f32.mrf.mxu0
      %v525 = vadd.f32 %v356, %v524
      %526 = vmatmul.f32.gmra.mxu0 %v399
      %v527 = vpop.f32.mrf.mxu0
      %v528 = vadd.f32 %v356, %v527
      %529 = vmatmul.f32.gmra.mxu0 %v402
      %v530 = vpop.f32.mrf.mxu0
      %v531 = vadd.f32 %v356, %v530
      %532 = vmatmul.f32.gmra.mxu0 %v405
      %v533 = vpop.f32.mrf.mxu0
      %v534 = vadd.f32 %v356, %v533
      %535 = vmatmul.f32.gmra.mxu0 %v408
      %v536 = vpop.f32.mrf.mxu0
      %v537 = vadd.f32 %v356, %v536
      %538 = vmatmul.f32.gmra.mxu0 %v411
      %v539 = vpop.f32.mrf.mxu0
      %v540 = vadd.f32 %v356, %v539
      %541 = vmatmul.f32.gmra.mxu0 %v414
      %v542 = vpop.f32.mrf.mxu0
      %v543 = vadd.f32 %v356, %v542
      %544 = vmatmul.f32.gmra.mxu0 %v417
      %v545 = vpop.f32.mrf.mxu0
      %v546 = vadd.f32 %v356, %v545
      %547 = vmatmul.f32.gmra.mxu0 %v420
      %v548 = vpop.f32.mrf.mxu0
      %v549 = vadd.f32 %v356, %v548
      %550 = vmatmul.f32.gmra.mxu0 %v423
      %v551 = vpop.f32.mrf.mxu0
      %v552 = vadd.f32 %v356, %v551
      %553 = vmatmul.f32.gmra.mxu0 %v426
      %v554 = vpop.f32.mrf.mxu0
      %v555 = vadd.f32 %v356, %v554
      %556 = vmatmul.f32.gmra.mxu0 %v429
      %v557 = vpop.f32.mrf.mxu0
      %v558 = vadd.f32 %v356, %v557
      %559 = vmatmul.f32.gmra.mxu0 %v432
      %v560 = vpop.f32.mrf.mxu0
      %v561 = vadd.f32 %v356, %v560
      %562 = vmatmul.f32.gmra.mxu0 %v435
      %v563 = vpop.f32.mrf.mxu0
      %v564 = vadd.f32 %v356, %v563
      %565 = vmatmul.f32.gmra.mxu0 %v438
      %v566 = vpop.f32.mrf.mxu0
      %v567 = vadd.f32 %v356, %v566
      %568 = vmatmul.f32.gmra.mxu0 %v441
      %v569 = vpop.f32.mrf.mxu0
      %v570 = vadd.f32 %v356, %v569
      %571 = vmatmul.f32.gmra.mxu0 %v444
      %v572 = vpop.f32.mrf.mxu0
      %v573 = vadd.f32 %v356, %v572
      %574 = vmatmul.f32.gmra.mxu0 %v447
      %v575 = vpop.f32.mrf.mxu0
      %v576 = vadd.f32 %v356, %v575
      %577 = vmatmul.f32.gmra.mxu0 %v450
      %v578 = vpop.f32.mrf.mxu0
      %v579 = vadd.f32 %v356, %v578
      %580 = vmatmul.f32.gmra.mxu0 %v453
      %v581 = vpop.f32.mrf.mxu0
      %v582 = vadd.f32 %v356, %v581
      %583 = vmatmul.f32.gmra.mxu0 %v456
      %v584 = vpop.f32.mrf.mxu0
      %v585 = vadd.f32 %v356, %v584
      %586 = vmatmul.f32.gmra.mxu0 %v459
      %v587 = vpop.f32.mrf.mxu0
      %v588 = vadd.f32 %v356, %v587
      %589 = vmatmul.f32.gmra.mxu0 %v462
      %v590 = vpop.f32.mrf.mxu0
      %v591 = vadd.f32 %v356, %v590
      %592 = vmatmul.f32.gmra.mxu0 %v465
      %v593 = vpop.f32.mrf.mxu0
      %v594 = vadd.f32 %v356, %v593
      %595 = vdwg.mxu0
      %v596 = vmax.f32 %v489, 0.0
      %v597 = vmax.f32 %v492, 0.0
      %v598 = vmax.f32 %v495, 0.0
      %v599 = vmax.f32 %v498, 0.0
      %v600 = vmax.f32 %v501, 0.0
      %v601 = vmax.f32 %v504, 0.0
      %v602 = vmax.f32 %v507, 0.0
      %v603 = vmax.f32 %v510, 0.0
      %v604 = vmax.f32 %v513, 0.0
      %v605 = vmax.f32 %v516, 0.0
      %v606 = vmax.f32 %v519, 0.0
      %v607 = vmax.f32 %v522, 0.0
      %v608 = vmax.f32 %v525, 0.0
      %v609 = vmax.f32 %v528, 0.0
      %v610 = vmax.f32 %v531, 0.0
      %v611 = vmax.f32 %v534, 0.0
      %v612 = vmax.f32 %v537, 0.0
      %v613 = vmax.f32 %v540, 0.0
      %v614 = vmax.f32 %v543, 0.0
      %v615 = vmax.f32 %v546, 0.0
      %v616 = vmax.f32 %v549, 0.0
      %v617 = vmax.f32 %v552, 0.0
      %v618 = vmax.f32 %v555, 0.0
      %v619 = vmax.f32 %v558, 0.0
      %v620 = vmax.f32 %v561, 0.0
      %v621 = vmax.f32 %v564, 0.0
      %v622 = vmax.f32 %v567, 0.0
      %v623 = vmax.f32 %v570, 0.0
      %v624 = vmax.f32 %v573, 0.0
      %v625 = vmax.f32 %v576, 0.0
      %v626 = vmax.f32 %v579, 0.0
      %v627 = vmax.f32 %v582, 0.0
      %v628 = vmax.f32 %v585, 0.0
      %v629 = vmax.f32 %v588, 0.0
      %v630 = vmax.f32 %v591, 0.0
      %v631 = vmax.f32 %v594, 0.0
      %v632 = vmin.f32 %v596, 6.0
      %v633 = vmin.f32 %v597, 6.0
      %v634 = vmin.f32 %v598, 6.0
      %v635 = vmin.f32 %v599, 6.0
      %v636 = vmin.f32 %v600, 6.0
      %v637 = vmin.f32 %v601, 6.0
      %v638 = vmin.f32 %v602, 6.0
      %v639 = vmin.f32 %v603, 6.0
      %v640 = vmin.f32 %v604, 6.0
      %v641 = vmin.f32 %v605, 6.0
      %v642 = vmin.f32 %v606, 6.0
      %v643 = vmin.f32 %v607, 6.0
      %v644 = vmin.f32 %v608, 6.0
      %v645 = vmin.f32 %v609, 6.0
      %v646 = vmin.f32 %v610, 6.0
      %v647 = vmin.f32 %v611, 6.0
      %v648 = vmin.f32 %v612, 6.0
      %v649 = vmin.f32 %v613, 6.0
      %v650 = vmin.f32 %v614, 6.0
      %v651 = vmin.f32 %v615, 6.0
      %v652 = vmin.f32 %v616, 6.0
      %v653 = vmin.f32 %v617, 6.0
      %v654 = vmin.f32 %v618, 6.0
      %v655 = vmin.f32 %v619, 6.0
      %v656 = vmin.f32 %v620, 6.0
      %v657 = vmin.f32 %v621, 6.0
      %v658 = vmin.f32 %v622, 6.0
      %v659 = vmin.f32 %v623, 6.0
      %v660 = vmin.f32 %v624, 6.0
      %v661 = vmin.f32 %v625, 6.0
      %v662 = vmin.f32 %v626, 6.0
      %v663 = vmin.f32 %v627, 6.0
      %v664 = vmin.f32 %v628, 6.0
      %v665 = vmin.f32 %v629, 6.0
      %v666 = vmin.f32 %v630, 6.0
      %v667 = vmin.f32 %v631, 6.0
      %668 = vst [vmem:[#allocation2] sm:$0x1] 0.0
      %669 = vst [vmem:[#allocation2 + $0x18] sm:$0x1] 0.0
      %670 = vst [vmem:[#allocation2 + $0x30] sm:$0x1] 0.0
      %671 = vst [vmem:[#allocation2 + $0x48] sm:$0x1] 0.0
      %672 = vst [vmem:[#allocation2 + $0x60] sm:$0x1] 0.0
      %673 = vst [vmem:[#allocation2 + $0x78] sm:$0x1] 0.0
      %674 = vst [vmem:[#allocation2 + $0x90] sm:$0x1] 0.0
      %675 = vst [vmem:[#allocation2 + $0xa8] sm:$0x1] 0.0
      %676 = vst [vmem:[#allocation2 + $0xc0] sm:$0x1] 0.0
      %677 = vst [vmem:[#allocation2 + $0xd8] sm:$0x1] 0.0
      %678 = vst [vmem:[#allocation2 + $0xf0] sm:$0x1] 0.0
      %679 = vst [vmem:[#allocation2 + $0x108] sm:$0x1] 0.0
      %680 = vst [vmem:[#allocation2 + $0x120] sm:$0x1] 0.0
      %681 = vst [vmem:[#allocation2 + $0x138] sm:$0x1] 0.0
      %682 = vst [vmem:[#allocation2 + $0x150] sm:$0x1] 0.0
      %683 = vst [vmem:[#allocation2 + $0x168] sm:$0x1] 0.0
      %684 = vst [vmem:[#allocation2 + $0x180] sm:$0x1] 0.0
      %685 = vst [vmem:[#allocation2 + $0x198] sm:$0x1] 0.0
      %686 = vst [vmem:[#allocation2 + $0x11] sm:$0x1] 0.0
      %687 = vst [vmem:[#allocation2 + $0x29] sm:$0x1] 0.0
      %688 = vst [vmem:[#allocation2 + $0x41] sm:$0x1] 0.0
      %689 = vst [vmem:[#allocation2 + $0x59] sm:$0x1] 0.0
      %690 = vst [vmem:[#allocation2 + $0x71] sm:$0x1] 0.0
      %691 = vst [vmem:[#allocation2 + $0x89] sm:$0x1] 0.0
      %692 = vst [vmem:[#allocation2 + $0xa1] sm:$0x1] 0.0
      %693 = vst [vmem:[#allocation2 + $0xb9] sm:$0x1] 0.0
      %694 = vst [vmem:[#allocation2 + $0xd1] sm:$0x1] 0.0
      %695 = vst [vmem:[#allocation2 + $0xe9] sm:$0x1] 0.0
      %696 = vst [vmem:[#allocation2 + $0x101] sm:$0x1] 0.0
      %697 = vst [vmem:[#allocation2 + $0x119] sm:$0x1] 0.0
      %698 = vst [vmem:[#allocation2 + $0x131] sm:$0x1] 0.0
      %699 = vst [vmem:[#allocation2 + $0x149] sm:$0x1] 0.0
      %700 = vst [vmem:[#allocation2 + $0x161] sm:$0x1] 0.0
      %701 = vst [vmem:[#allocation2 + $0x179] sm:$0x1] 0.0
      %702 = vst [vmem:[#allocation2 + $0x191] sm:$0x1] 0.0
      %703 = vst [vmem:[#allocation2 + $0x1a9] sm:$0x1] 0.0
      %704 = vst [vmem:[#allocation2 + $0x1] sm:$0xff] %v632
      %705 = vst [vmem:[#allocation2 + $0x9] sm:$0xff] %v633
      %706 = vst [vmem:[#allocation2 + $0x19] sm:$0xff] %v634
      %707 = vst [vmem:[#allocation2 + $0x21] sm:$0xff] %v635
      %708 = vst [vmem:[#allocation2 + $0x31] sm:$0xff] %v636
      %709 = vst [vmem:[#allocation2 + $0x39] sm:$0xff] %v637
      %710 = vst [vmem:[#allocation2 + $0x49] sm:$0xff] %v638
      %711 = vst [vmem:[#allocation2 + $0x51] sm:$0xff] %v639
      %712 = vst [vmem:[#allocation2 + $0x61] sm:$0xff] %v640
      %713 = vst [vmem:[#allocation2 + $0x69] sm:$0xff] %v641
      %714 = vst [vmem:[#allocation2 + $0x79] sm:$0xff] %v642
      %715 = vst [vmem:[#allocation2 + $0x81] sm:$0xff] %v643
      %716 = vst [vmem:[#allocation2 + $0x91] sm:$0xff] %v644
      %717 = vst [vmem:[#allocation2 + $0x99] sm:$0xff] %v645
      %718 = vst [vmem:[#allocation2 + $0xa9] sm:$0xff] %v646
      %719 = vst [vmem:[#allocation2 + $0xb1] sm:$0xff] %v647
      %720 = vst [vmem:[#allocation2 + $0xc1] sm:$0xff] %v648
      %721 = vst [vmem:[#allocation2 + $0xc9] sm:$0xff] %v649
      %722 = vst [vmem:[#allocation2 + $0xd9] sm:$0xff] %v650
      %723 = vst [vmem:[#allocation2 + $0xe1] sm:$0xff] %v651
      %724 = vst [vmem:[#allocation2 + $0xf1] sm:$0xff] %v652
      %725 = vst [vmem:[#allocation2 + $0xf9] sm:$0xff] %v653
      %726 = vst [vmem:[#allocation2 + $0x109] sm:$0xff] %v654
      %727 = vst [vmem:[#allocation2 + $0x111] sm:$0xff] %v655
      %728 = vst [vmem:[#allocation2 + $0x121] sm:$0xff] %v656
      %729 = vst [vmem:[#allocation2 + $0x129] sm:$0xff] %v657
      %730 = vst [vmem:[#allocation2 + $0x139] sm:$0xff] %v658
      %731 = vst [vmem:[#allocation2 + $0x141] sm:$0xff] %v659
      %732 = vst [vmem:[#allocation2 + $0x151] sm:$0xff] %v660
      %733 = vst [vmem:[#allocation2 + $0x159] sm:$0xff] %v661
      %734 = vst [vmem:[#allocation2 + $0x169] sm:$0xff] %v662
      %735 = vst [vmem:[#allocation2 + $0x171] sm:$0xff] %v663
      %736 = vst [vmem:[#allocation2 + $0x181] sm:$0xff] %v664
      %737 = vst [vmem:[#allocation2 + $0x189] sm:$0xff] %v665
      %738 = vst [vmem:[#allocation2 + $0x199] sm:$0xff] %v666
      %739 = vst [vmem:[#allocation2 + $0x1a1] sm:$0xff] %v667
      %p740 = scmp.eq.s32.totalorder %s304, 0
      // Predicated region
      $region49: #{inverted_residual_bottleneck.1} parent=47 // pred_check
        %p741 = pneg %p740
      $region50: #{inverted_residual_bottleneck.1} parent=47 // pred_check_branch
        %743 = sbr.rel (%p741) target = $region52
      $region51: #{inverted_residual_bottleneck.1} parent=47 // pred_region
        %744 = vst [vmem:[#allocation2 + $0x1] sm:$0xff] 0.0
        %745 = vst [vmem:[#allocation2 + $0x9] sm:$0xff] 0.0
      $region52: #{inverted_residual_bottleneck.1} parent=47 // pred_fallthru
        _
      %p746 = scmp.ge.s32.totalorder %s346, 16
      // Predicated region
      $region53: #{inverted_residual_bottleneck.1} parent=47 // pred_check
        %p747 = pneg %p746
      $region54: #{inverted_residual_bottleneck.1} parent=47 // pred_check_branch
        %749 = sbr.rel (%p747) target = $region56
      $region55: #{inverted_residual_bottleneck.1} parent=47 // pred_region
        %s750 = scalar_lea.vmem [#allocation2], 408
        %751 = vst [vmem:[%s750 + $0x1] sm:$0xff] 0.0
        %752 = vst [vmem:[%s750 + $0x9] sm:$0xff] 0.0
      $region56: #{inverted_residual_bottleneck.1} parent=47 // pred_fallthru
        _
      %v753 = vld [vmem:[%s3] sm:$0xff]
      %v754 = vld [vmem:[%s3 + $0x8] sm:$0x1]
      %v755 = vld [vmem:[#allocation2] sm:$0xff]
      %v756 = vld [vmem:[#allocation2 + $0x8] sm:$0xff]
      %v757 = vld [vmem:[#allocation2 + $0x18] sm:$0xff]
      %v758 = vld [vmem:[#allocation2 + $0x20] sm:$0xff]
      %v759 = vld [vmem:[#allocation2 + $0x30] sm:$0xff]
      %v760 = vld [vmem:[#allocation2 + $0x38] sm:$0xff]
      %v761 = vld [vmem:[#allocation2 + $0x48] sm:$0xff]
      %v762 = vld [vmem:[#allocation2 + $0x50] sm:$0xff]
      %v763 = vld [vmem:[#allocation2 + $0x60] sm:$0xff]
      %v764 = vld [vmem:[#allocation2 + $0x68] sm:$0xff]
      %v765 = vld [vmem:[#allocation2 + $0x78] sm:$0xff]
      %v766 = vld [vmem:[#allocation2 + $0x80] sm:$0xff]
      %v767 = vld [vmem:[#allocation2 + $0x90] sm:$0xff]
      %v768 = vld [vmem:[#allocation2 + $0x98] sm:$0xff]
      %v769 = vld [vmem:[#allocation2 + $0xa8] sm:$0xff]
      %v770 = vld [vmem:[#allocation2 + $0xb0] sm:$0xff]
      %v771 = vld [vmem:[#allocation2 + $0xc0] sm:$0xff]
      %v772 = vld [vmem:[#allocation2 + $0xc8] sm:$0xff]
      %v773 = vld [vmem:[#allocation2 + $0xd8] sm:$0xff]
      %v774 = vld [vmem:[#allocation2 + $0xe0] sm:$0xff]
      %v775 = vld [vmem:[#allocation2 + $0xf0] sm:$0xff]
      %v776 = vld [vmem:[#allocation2 + $0xf8] sm:$0xff]
      %v777 = vld [vmem:[#allocation2 + $0x108] sm:$0xff]
      %v778 = vld [vmem:[#allocation2 + $0x110] sm:$0xff]
      %v779 = vld [vmem:[#allocation2 + $0x120] sm:$0xff]
      %v780 = vld [vmem:[#allocation2 + $0x128] sm:$0xff]
      %v781 = vld [vmem:[#allocation2 + $0x138] sm:$0xff]
      %v782 = vld [vmem:[#allocation2 + $0x140] sm:$0xff]
      %v783 = vld [vmem:[#allocation2 + $0x150] sm:$0xff]
      %v784 = vld [vmem:[#allocation2 + $0x158] sm:$0xff]
      %v785 = vld [vmem:[#allocation2 + $0x168] sm:$0xff]
      %v786 = vld [vmem:[#allocation2 + $0x170] sm:$0xff]
      %v787 = vperm.slane %v753, 0
      %v788 = vmul.f32 %v755, %v787
      %v789 = vmul.f32 %v756, %v787
      %v790 = vmul.f32 %v757, %v787
      %v791 = vmul.f32 %v758, %v787
      %v792 = vmul.f32 %v759, %v787
      %v793 = vmul.f32 %v760, %v787
      %v794 = vmul.f32 %v761, %v787
      %v795 = vmul.f32 %v762, %v787
      %v796 = vmul.f32 %v763, %v787
      %v797 = vmul.f32 %v764, %v787
      %v798 = vmul.f32 %v765, %v787
      %v799 = vmul.f32 %v766, %v787
      %v800 = vmul.f32 %v767, %v787
      %v801 = vmul.f32 %v768, %v787
      %v802 = vmul.f32 %v769, %v787
      %v803 = vmul.f32 %v770, %v787
      %v804 = vmul.f32 %v771, %v787
      %v805 = vmul.f32 %v772, %v787
      %v806 = vmul.f32 %v773, %v787
      %v807 = vmul.f32 %v774, %v787
      %v808 = vmul.f32 %v775, %v787
      %v809 = vmul.f32 %v776, %v787
      %v810 = vmul.f32 %v777, %v787
      %v811 = vmul.f32 %v778, %v787
      %v812 = vmul.f32 %v779, %v787
      %v813 = vmul.f32 %v780, %v787
      %v814 = vmul.f32 %v781, %v787
      %v815 = vmul.f32 %v782, %v787
      %v816 = vmul.f32 %v783, %v787
      %v817 = vmul.f32 %v784, %v787
      %v818 = vmul.f32 %v785, %v787
      %v819 = vmul.f32 %v786, %v787
      %v820 = vadd.f32 %v788, 0.0
      %v821 = vadd.f32 %v789, 0.0
      %v822 = vadd.f32 %v790, 0.0
      %v823 = vadd.f32 %v791, 0.0
      %v824 = vadd.f32 %v792, 0.0
      %v825 = vadd.f32 %v793, 0.0
      %v826 = vadd.f32 %v794, 0.0
      %v827 = vadd.f32 %v795, 0.0
      %v828 = vadd.f32 %v796, 0.0
      %v829 = vadd.f32 %v797, 0.0
      %v830 = vadd.f32 %v798, 0.0
      %v831 = vadd.f32 %v799, 0.0
      %v832 = vadd.f32 %v800, 0.0
      %v833 = vadd.f32 %v801, 0.0
      %v834 = vadd.f32 %v802, 0.0
      %v835 = vadd.f32 %v803, 0.0
      %v836 = vadd.f32 %v804, 0.0
      %v837 = vadd.f32 %v805, 0.0
      %v838 = vadd.f32 %v806, 0.0
      %v839 = vadd.f32 %v807, 0.0
      %v840 = vadd.f32 %v808, 0.0
      %v841 = vadd.f32 %v809, 0.0
      %v842 = vadd.f32 %v810, 0.0
      %v843 = vadd.f32 %v811, 0.0
      %v844 = vadd.f32 %v812, 0.0
      %v845 = vadd.f32 %v813, 0.0
      %v846 = vadd.f32 %v814, 0.0
      %v847 = vadd.f32 %v815, 0.0
      %v848 = vadd.f32 %v816, 0.0
      %v849 = vadd.f32 %v817, 0.0
      %v850 = vadd.f32 %v818, 0.0
      %v851 = vadd.f32 %v819, 0.0
      %v852 = vld [vmem:[#allocation2 + $0x1] sm:$0xff]
      %v853 = vld [vmem:[#allocation2 + $0x9] sm:$0xff]
      %v854 = vld [vmem:[#allocation2 + $0x19] sm:$0xff]
      %v855 = vld [vmem:[#allocation2 + $0x21] sm:$0xff]
      %v856 = vld [vmem:[#allocation2 + $0x31] sm:$0xff]
      %v857 = vld [vmem:[#allocation2 + $0x39] sm:$0xff]
      %v858 = vld [vmem:[#allocation2 + $0x49] sm:$0xff]
      %v859 = vld [vmem:[#allocation2 + $0x51] sm:$0xff]
      %v860 = vld [vmem:[#allocation2 + $0x61] sm:$0xff]
      %v861 = vld [vmem:[#allocation2 + $0x69] sm:$0xff]
      %v862 = vld [vmem:[#allocation2 + $0x79] sm:$0xff]
      %v863 = vld [vmem:[#allocation2 + $0x81] sm:$0xff]
      %v864 = vld [vmem:[#allocation2 + $0x91] sm:$0xff]
      %v865 = vld [vmem:[#allocation2 + $0x99] sm:$0xff]
      %v866 = vld [vmem:[#allocation2 + $0xa9] sm:$0xff]
      %v867 = vld [vmem:[#allocation2 + $0xb1] sm:$0xff]
      %v868 = vld [vmem:[#allocation2 + $0xc1] sm:$0xff]
      %v869 = vld [vmem:[#allocation2 + $0xc9] sm:$0xff]
      %v870 = vld [vmem:[#allocation2 + $0xd9] sm:$0xff]
      %v871 = vld [vmem:[#allocation2 + $0xe1] sm:$0xff]
      %v872 = vld [vmem:[#allocation2 + $0xf1] sm:$0xff]
      %v873 = vld [vmem:[#allocation2 + $0xf9] sm:$0xff]
      %v874 = vld [vmem:[#allocation2 + $0x109] sm:$0xff]
      %v875 = vld [vmem:[#allocation2 + $0x111] sm:$0xff]
      %v876 = vld [vmem:[#allocation2 + $0x121] sm:$0xff]
      %v877 = vld [vmem:[#allocation2 + $0x129] sm:$0xff]
      %v878 = vld [vmem:[#allocation2 + $0x139] sm:$0xff]
      %v879 = vld [vmem:[#allocation2 + $0x141] sm:$0xff]
      %v880 = vld [vmem:[#allocation2 + $0x151] sm:$0xff]
      %v881 = vld [vmem:[#allocation2 + $0x159] sm:$0xff]
      %v882 = vld [vmem:[#allocation2 + $0x169] sm:$0xff]
      %v883 = vld [vmem:[#allocation2 + $0x171] sm:$0xff]
      %v884 = vperm.slane %v753, 1
      %v885 = vmul.f32 %v852, %v884
      %v886 = vmul.f32 %v853, %v884
      %v887 = vmul.f32 %v854, %v884
      %v888 = vmul.f32 %v855, %v884
      %v889 = vmul.f32 %v856, %v884
      %v890 = vmul.f32 %v857, %v884
      %v891 = vmul.f32 %v858, %v884
      %v892 = vmul.f32 %v859, %v884
      %v893 = vmul.f32 %v860, %v884
      %v894 = vmul.f32 %v861, %v884
      %v895 = vmul.f32 %v862, %v884
      %v896 = vmul.f32 %v863, %v884
      %v897 = vmul.f32 %v864, %v884
      %v898 = vmul.f32 %v865, %v884
      %v899 = vmul.f32 %v866, %v884
      %v900 = vmul.f32 %v867, %v884
      %v901 = vmul.f32 %v868, %v884
      %v902 = vmul.f32 %v869, %v884
      %v903 = vmul.f32 %v870, %v884
      %v904 = vmul.f32 %v871, %v884
      %v905 = vmul.f32 %v872, %v884
      %v906 = vmul.f32 %v873, %v884
      %v907 = vmul.f32 %v874, %v884
      %v908 = vmul.f32 %v875, %v884
      %v909 = vmul.f32 %v876, %v884
      %v910 = vmul.f32 %v877, %v884
      %v911 = vmul.f32 %v878, %v884
      %v912 = vmul.f32 %v879, %v884
      %v913 = vmul.f32 %v880, %v884
      %v914 = vmul.f32 %v881, %v884
      %v915 = vmul.f32 %v882, %v884
      %v916 = vmul.f32 %v883, %v884
      %v917 = vadd.f32 %v820, %v885
      %v918 = vadd.f32 %v821, %v886
      %v919 = vadd.f32 %v822, %v887
      %v920 = vadd.f32 %v823, %v888
      %v921 = vadd.f32 %v824, %v889
      %v922 = vadd.f32 %v825, %v890
      %v923 = vadd.f32 %v826, %v891
      %v924 = vadd.f32 %v827, %v892
      %v925 = vadd.f32 %v828, %v893
      %v926 = vadd.f32 %v829, %v894
      %v927 = vadd.f32 %v830, %v895
      %v928 = vadd.f32 %v831, %v896
      %v929 = vadd.f32 %v832, %v897
      %v930 = vadd.f32 %v833, %v898
      %v931 = vadd.f32 %v834, %v899
      %v932 = vadd.f32 %v835, %v900
      %v933 = vadd.f32 %v836, %v901
      %v934 = vadd.f32 %v837, %v902
      %v935 = vadd.f32 %v838, %v903
      %v936 = vadd.f32 %v839, %v904
      %v937 = vadd.f32 %v840, %v905
      %v938 = vadd.f32 %v841, %v906
      %v939 = vadd.f32 %v842, %v907
      %v940 = vadd.f32 %v843, %v908
      %v941 = vadd.f32 %v844, %v909
      %v942 = vadd.f32 %v845, %v910
      %v943 = vadd.f32 %v846, %v911
      %v944 = vadd.f32 %v847, %v912
      %v945 = vadd.f32 %v848, %v913
      %v946 = vadd.f32 %v849, %v914
      %v947 = vadd.f32 %v850, %v915
      %v948 = vadd.f32 %v851, %v916
      %v949 = vld [vmem:[#allocation2 + $0x2] sm:$0xff]
      %v950 = vld [vmem:[#allocation2 + $0xa] sm:$0xff]
      %v951 = vld [vmem:[#allocation2 + $0x1a] sm:$0xff]
      %v952 = vld [vmem:[#allocation2 + $0x22] sm:$0xff]
      %v953 = vld [vmem:[#allocation2 + $0x32] sm:$0xff]
      %v954 = vld [vmem:[#allocation2 + $0x3a] sm:$0xff]
      %v955 = vld [vmem:[#allocation2 + $0x4a] sm:$0xff]
      %v956 = vld [vmem:[#allocation2 + $0x52] sm:$0xff]
      %v957 = vld [vmem:[#allocation2 + $0x62] sm:$0xff]
      %v958 = vld [vmem:[#allocation2 + $0x6a] sm:$0xff]
      %v959 = vld [vmem:[#allocation2 + $0x7a] sm:$0xff]
      %v960 = vld [vmem:[#allocation2 + $0x82] sm:$0xff]
      %v961 = vld [vmem:[#allocation2 + $0x92] sm:$0xff]
      %v962 = vld [vmem:[#allocation2 + $0x9a] sm:$0xff]
      %v963 = vld [vmem:[#allocation2 + $0xaa] sm:$0xff]
      %v964 = vld [vmem:[#allocation2 + $0xb2] sm:$0xff]
      %v965 = vld [vmem:[#allocation2 + $0xc2] sm:$0xff]
      %v966 = vld [vmem:[#allocation2 + $0xca] sm:$0xff]
      %v967 = vld [vmem:[#allocation2 + $0xda] sm:$0xff]
      %v968 = vld [vmem:[#allocation2 + $0xe2] sm:$0xff]
      %v969 = vld [vmem:[#allocation2 + $0xf2] sm:$0xff]
      %v970 = vld [vmem:[#allocation2 + $0xfa] sm:$0xff]
      %v971 = vld [vmem:[#allocation2 + $0x10a] sm:$0xff]
      %v972 = vld [vmem:[#allocation2 + $0x112] sm:$0xff]
      %v973 = vld [vmem:[#allocation2 + $0x122] sm:$0xff]
      %v974 = vld [vmem:[#allocation2 + $0x12a] sm:$0xff]
      %v975 = vld [vmem:[#allocation2 + $0x13a] sm:$0xff]
      %v976 = vld [vmem:[#allocation2 + $0x142] sm:$0xff]
      %v977 = vld [vmem:[#allocation2 + $0x152] sm:$0xff]
      %v978 = vld [vmem:[#allocation2 + $0x15a] sm:$0xff]
      %v979 = vld [vmem:[#allocation2 + $0x16a] sm:$0xff]
      %v980 = vld [vmem:[#allocation2 + $0x172] sm:$0xff]
      %v981 = vperm.slane %v753, 2
      %v982 = vmul.f32 %v949, %v981
      %v983 = vmul.f32 %v950, %v981
      %v984 = vmul.f32 %v951, %v981
      %v985 = vmul.f32 %v952, %v981
      %v986 = vmul.f32 %v953, %v981
      %v987 = vmul.f32 %v954, %v981
      %v988 = vmul.f32 %v955, %v981
      %v989 = vmul.f32 %v956, %v981
      %v990 = vmul.f32 %v957, %v981
      %v991 = vmul.f32 %v958, %v981
      %v992 = vmul.f32 %v959, %v981
      %v993 = vmul.f32 %v960, %v981
      %v994 = vmul.f32 %v961, %v981
      %v995 = vmul.f32 %v962, %v981
      %v996 = vmul.f32 %v963, %v981
      %v997 = vmul.f32 %v964, %v981
      %v998 = vmul.f32 %v965, %v981
      %v999 = vmul.f32 %v966, %v981
      %v1000 = vmul.f32 %v967, %v981
      %v1001 = vmul.f32 %v968, %v981
      %v1002 = vmul.f32 %v969, %v981
      %v1003 = vmul.f32 %v970, %v981
      %v1004 = vmul.f32 %v971, %v981
      %v1005 = vmul.f32 %v972, %v981
      %v1006 = vmul.f32 %v973, %v981
      %v1007 = vmul.f32 %v974, %v981
      %v1008 = vmul.f32 %v975, %v981
      %v1009 = vmul.f32 %v976, %v981
      %v1010 = vmul.f32 %v977, %v981
      %v1011 = vmul.f32 %v978, %v981
      %v1012 = vmul.f32 %v979, %v981
      %v1013 = vmul.f32 %v980, %v981
      %v1014 = vadd.f32 %v917, %v982
      %v1015 = vadd.f32 %v918, %v983
      %v1016 = vadd.f32 %v919, %v984
      %v1017 = vadd.f32 %v920, %v985
      %v1018 = vadd.f32 %v921, %v986
      %v1019 = vadd.f32 %v922, %v987
      %v1020 = vadd.f32 %v923, %v988
      %v1021 = vadd.f32 %v924, %v989
      %v1022 = vadd.f32 %v925, %v990
      %v1023 = vadd.f32 %v926, %v991
      %v1024 = vadd.f32 %v927, %v992
      %v1025 = vadd.f32 %v928, %v993
      %v1026 = vadd.f32 %v929, %v994
      %v1027 = vadd.f32 %v930, %v995
      %v1028 = vadd.f32 %v931, %v996
      %v1029 = vadd.f32 %v932, %v997
      %v1030 = vadd.f32 %v933, %v998
      %v1031 = vadd.f32 %v934, %v999
      %v1032 = vadd.f32 %v935, %v1000
      %v1033 = vadd.f32 %v936, %v1001
      %v1034 = vadd.f32 %v937, %v1002
      %v1035 = vadd.f32 %v938, %v1003
      %v1036 = vadd.f32 %v939, %v1004
      %v1037 = vadd.f32 %v940, %v1005
      %v1038 = vadd.f32 %v941, %v1006
      %v1039 = vadd.f32 %v942, %v1007
      %v1040 = vadd.f32 %v943, %v1008
      %v1041 = vadd.f32 %v944, %v1009
      %v1042 = vadd.f32 %v945, %v1010
      %v1043 = vadd.f32 %v946, %v1011
      %v1044 = vadd.f32 %v947, %v1012
      %v1045 = vadd.f32 %v948, %v1013
      %s1046 = scalar_lea.vmem [#allocation2], 24
      %v1047 = vld [vmem:[%s1046] sm:$0xff]
      %v1048 = vld [vmem:[%s1046 + $0x8] sm:$0xff]
      %v1049 = vld [vmem:[%s1046 + $0x18] sm:$0xff]
      %v1050 = vld [vmem:[%s1046 + $0x20] sm:$0xff]
      %v1051 = vld [vmem:[%s1046 + $0x30] sm:$0xff]
      %v1052 = vld [vmem:[%s1046 + $0x38] sm:$0xff]
      %v1053 = vld [vmem:[%s1046 + $0x48] sm:$0xff]
      %v1054 = vld [vmem:[%s1046 + $0x50] sm:$0xff]
      %v1055 = vld [vmem:[%s1046 + $0x60] sm:$0xff]
      %v1056 = vld [vmem:[%s1046 + $0x68] sm:$0xff]
      %v1057 = vld [vmem:[%s1046 + $0x78] sm:$0xff]
      %v1058 = vld [vmem:[%s1046 + $0x80] sm:$0xff]
      %v1059 = vld [vmem:[%s1046 + $0x90] sm:$0xff]
      %v1060 = vld [vmem:[%s1046 + $0x98] sm:$0xff]
      %v1061 = vld [vmem:[%s1046 + $0xa8] sm:$0xff]
      %v1062 = vld [vmem:[%s1046 + $0xb0] sm:$0xff]
      %v1063 = vld [vmem:[%s1046 + $0xc0] sm:$0xff]
      %v1064 = vld [vmem:[%s1046 + $0xc8] sm:$0xff]
      %v1065 = vld [vmem:[%s1046 + $0xd8] sm:$0xff]
      %v1066 = vld [vmem:[%s1046 + $0xe0] sm:$0xff]
      %v1067 = vld [vmem:[%s1046 + $0xf0] sm:$0xff]
      %v1068 = vld [vmem:[%s1046 + $0xf8] sm:$0xff]
      %v1069 = vld [vmem:[%s1046 + $0x108] sm:$0xff]
      %v1070 = vld [vmem:[%s1046 + $0x110] sm:$0xff]
      %v1071 = vld [vmem:[%s1046 + $0x120] sm:$0xff]
      %v1072 = vld [vmem:[%s1046 + $0x128] sm:$0xff]
      %v1073 = vld [vmem:[%s1046 + $0x138] sm:$0xff]
      %v1074 = vld [vmem:[%s1046 + $0x140] sm:$0xff]
      %v1075 = vld [vmem:[%s1046 + $0x150] sm:$0xff]
      %v1076 = vld [vmem:[%s1046 + $0x158] sm:$0xff]
      %v1077 = vld [vmem:[%s1046 + $0x168] sm:$0xff]
      %v1078 = vld [vmem:[%s1046 + $0x170] sm:$0xff]
      %v1079 = vperm.slane %v753, 3
      %v1080 = vmul.f32 %v1047, %v1079
      %v1081 = vmul.f32 %v1048, %v1079
      %v1082 = vmul.f32 %v1049, %v1079
      %v1083 = vmul.f32 %v1050, %v1079
      %v1084 = vmul.f32 %v1051, %v1079
      %v1085 = vmul.f32 %v1052, %v1079
      %v1086 = vmul.f32 %v1053, %v1079
      %v1087 = vmul.f32 %v1054, %v1079
      %v1088 = vmul.f32 %v1055, %v1079
      %v1089 = vmul.f32 %v1056, %v1079
      %v1090 = vmul.f32 %v1057, %v1079
      %v1091 = vmul.f32 %v1058, %v1079
      %v1092 = vmul.f32 %v1059, %v1079
      %v1093 = vmul.f32 %v1060, %v1079
      %v1094 = vmul.f32 %v1061, %v1079
      %v1095 = vmul.f32 %v1062, %v1079
      %v1096 = vmul.f32 %v1063, %v1079
      %v1097 = vmul.f32 %v1064, %v1079
      %v1098 = vmul.f32 %v1065, %v1079
      %v1099 = vmul.f32 %v1066, %v1079
      %v1100 = vmul.f32 %v1067, %v1079
      %v1101 = vmul.f32 %v1068, %v1079
      %v1102 = vmul.f32 %v1069, %v1079
      %v1103 = vmul.f32 %v1070, %v1079
      %v1104 = vmul.f32 %v1071, %v1079
      %v1105 = vmul.f32 %v1072, %v1079
      %v1106 = vmul.f32 %v1073, %v1079
      %v1107 = vmul.f32 %v1074, %v1079
      %v1108 = vmul.f32 %v1075, %v1079
      %v1109 = vmul.f32 %v1076, %v1079
      %v1110 = vmul.f32 %v1077, %v1079
      %v1111 = vmul.f32 %v1078, %v1079
      %v1112 = vadd.f32 %v1014, %v1080
      %v1113 = vadd.f32 %v1015, %v1081
      %v1114 = vadd.f32 %v1016, %v1082
      %v1115 = vadd.f32 %v1017, %v1083
      %v1116 = vadd.f32 %v1018, %v1084
      %v1117 = vadd.f32 %v1019, %v1085
      %v1118 = vadd.f32 %v1020, %v1086
      %v1119 = vadd.f32 %v1021, %v1087
      %v1120 = vadd.f32 %v1022, %v1088
      %v1121 = vadd.f32 %v1023, %v1089
      %v1122 = vadd.f32 %v1024, %v1090
      %v1123 = vadd.f32 %v1025, %v1091
      %v1124 = vadd.f32 %v1026, %v1092
      %v1125 = vadd.f32 %v1027, %v1093
      %v1126 = vadd.f32 %v1028, %v1094
      %v1127 = vadd.f32 %v1029, %v1095
      %v1128 = vadd.f32 %v1030, %v1096
      %v1129 = vadd.f32 %v1031, %v1097
      %v1130 = vadd.f32 %v1032, %v1098
      %v1131 = vadd.f32 %v1033, %v1099
      %v1132 = vadd.f32 %v1034, %v1100
      %v1133 = vadd.f32 %v1035, %v1101
      %v1134 = vadd.f32 %v1036, %v1102
      %v1135 = vadd.f32 %v1037, %v1103
      %v1136 = vadd.f32 %v1038, %v1104
      %v1137 = vadd.f32 %v1039, %v1105
      %v1138 = vadd.f32 %v1040, %v1106
      %v1139 = vadd.f32 %v1041, %v1107
      %v1140 = vadd.f32 %v1042, %v1108
      %v1141 = vadd.f32 %v1043, %v1109
      %v1142 = vadd.f32 %v1044, %v1110
      %v1143 = vadd.f32 %v1045, %v1111
      %v1144 = vld [vmem:[%s1046 + $0x1] sm:$0xff]
      %v1145 = vld [vmem:[%s1046 + $0x9] sm:$0xff]
      %v1146 = vld [vmem:[%s1046 + $0x19] sm:$0xff]
      %v1147 = vld [vmem:[%s1046 + $0x21] sm:$0xff]
      %v1148 = vld [vmem:[%s1046 + $0x31] sm:$0xff]
      %v1149 = vld [vmem:[%s1046 + $0x39] sm:$0xff]
      %v1150 = vld [vmem:[%s1046 + $0x49] sm:$0xff]
      %v1151 = vld [vmem:[%s1046 + $0x51] sm:$0xff]
      %v1152 = vld [vmem:[%s1046 + $0x61] sm:$0xff]
      %v1153 = vld [vmem:[%s1046 + $0x69] sm:$0xff]
      %v1154 = vld [vmem:[%s1046 + $0x79] sm:$0xff]
      %v1155 = vld [vmem:[%s1046 + $0x81] sm:$0xff]
      %v1156 = vld [vmem:[%s1046 + $0x91] sm:$0xff]
      %v1157 = vld [vmem:[%s1046 + $0x99] sm:$0xff]
      %v1158 = vld [vmem:[%s1046 + $0xa9] sm:$0xff]
      %v1159 = vld [vmem:[%s1046 + $0xb1] sm:$0xff]
      %v1160 = vld [vmem:[%s1046 + $0xc1] sm:$0xff]
      %v1161 = vld [vmem:[%s1046 + $0xc9] sm:$0xff]
      %v1162 = vld [vmem:[%s1046 + $0xd9] sm:$0xff]
      %v1163 = vld [vmem:[%s1046 + $0xe1] sm:$0xff]
      %v1164 = vld [vmem:[%s1046 + $0xf1] sm:$0xff]
      %v1165 = vld [vmem:[%s1046 + $0xf9] sm:$0xff]
      %v1166 = vld [vmem:[%s1046 + $0x109] sm:$0xff]
      %v1167 = vld [vmem:[%s1046 + $0x111] sm:$0xff]
      %v1168 = vld [vmem:[%s1046 + $0x121] sm:$0xff]
      %v1169 = vld [vmem:[%s1046 + $0x129] sm:$0xff]
      %v1170 = vld [vmem:[%s1046 + $0x139] sm:$0xff]
      %v1171 = vld [vmem:[%s1046 + $0x141] sm:$0xff]
      %v1172 = vld [vmem:[%s1046 + $0x151] sm:$0xff]
      %v1173 = vld [vmem:[%s1046 + $0x159] sm:$0xff]
      %v1174 = vld [vmem:[%s1046 + $0x169] sm:$0xff]
      %v1175 = vld [vmem:[%s1046 + $0x171] sm:$0xff]
      %v1176 = vperm.slane %v753, 4
      %v1177 = vmul.f32 %v1144, %v1176
      %v1178 = vmul.f32 %v1145, %v1176
      %v1179 = vmul.f32 %v1146, %v1176
      %v1180 = vmul.f32 %v1147, %v1176
      %v1181 = vmul.f32 %v1148, %v1176
      %v1182 = vmul.f32 %v1149, %v1176
      %v1183 = vmul.f32 %v1150, %v1176
      %v1184 = vmul.f32 %v1151, %v1176
      %v1185 = vmul.f32 %v1152, %v1176
      %v1186 = vmul.f32 %v1153, %v1176
      %v1187 = vmul.f32 %v1154, %v1176
      %v1188 = vmul.f32 %v1155, %v1176
      %v1189 = vmul.f32 %v1156, %v1176
      %v1190 = vmul.f32 %v1157, %v1176
      %v1191 = vmul.f32 %v1158, %v1176
      %v1192 = vmul.f32 %v1159, %v1176
      %v1193 = vmul.f32 %v1160, %v1176
      %v1194 = vmul.f32 %v1161, %v1176
      %v1195 = vmul.f32 %v1162, %v1176
      %v1196 = vmul.f32 %v1163, %v1176
      %v1197 = vmul.f32 %v1164, %v1176
      %v1198 = vmul.f32 %v1165, %v1176
      %v1199 = vmul.f32 %v1166, %v1176
      %v1200 = vmul.f32 %v1167, %v1176
      %v1201 = vmul.f32 %v1168, %v1176
      %v1202 = vmul.f32 %v1169, %v1176
      %v1203 = vmul.f32 %v1170, %v1176
      %v1204 = vmul.f32 %v1171, %v1176
      %v1205 = vmul.f32 %v1172, %v1176
      %v1206 = vmul.f32 %v1173, %v1176
      %v1207 = vmul.f32 %v1174, %v1176
      %v1208 = vmul.f32 %v1175, %v1176
      %v1209 = vadd.f32 %v1112, %v1177
      %v1210 = vadd.f32 %v1113, %v1178
      %v1211 = vadd.f32 %v1114, %v1179
      %v1212 = vadd.f32 %v1115, %v1180
      %v1213 = vadd.f32 %v1116, %v1181
      %v1214 = vadd.f32 %v1117, %v1182
      %v1215 = vadd.f32 %v1118, %v1183
      %v1216 = vadd.f32 %v1119, %v1184
      %v1217 = vadd.f32 %v1120, %v1185
      %v1218 = vadd.f32 %v1121, %v1186
      %v1219 = vadd.f32 %v1122, %v1187
      %v1220 = vadd.f32 %v1123, %v1188
      %v1221 = vadd.f32 %v1124, %v1189
      %v1222 = vadd.f32 %v1125, %v1190
      %v1223 = vadd.f32 %v1126, %v1191
      %v1224 = vadd.f32 %v1127, %v1192
      %v1225 = vadd.f32 %v1128, %v1193
      %v1226 = vadd.f32 %v1129, %v1194
      %v1227 = vadd.f32 %v1130, %v1195
      %v1228 = vadd.f32 %v1131, %v1196
      %v1229 = vadd.f32 %v1132, %v1197
      %v1230 = vadd.f32 %v1133, %v1198
      %v1231 = vadd.f32 %v1134, %v1199
      %v1232 = vadd.f32 %v1135, %v1200
      %v1233 = vadd.f32 %v1136, %v1201
      %v1234 = vadd.f32 %v1137, %v1202
      %v1235 = vadd.f32 %v1138, %v1203
      %v1236 = vadd.f32 %v1139, %v1204
      %v1237 = vadd.f32 %v1140, %v1205
      %v1238 = vadd.f32 %v1141, %v1206
      %v1239 = vadd.f32 %v1142, %v1207
      %v1240 = vadd.f32 %v1143, %v1208
      %v1241 = vld [vmem:[%s1046 + $0x2] sm:$0xff]
      %v1242 = vld [vmem:[%s1046 + $0xa] sm:$0xff]
      %v1243 = vld [vmem:[%s1046 + $0x1a] sm:$0xff]
      %v1244 = vld [vmem:[%s1046 + $0x22] sm:$0xff]
      %v1245 = vld [vmem:[%s1046 + $0x32] sm:$0xff]
      %v1246 = vld [vmem:[%s1046 + $0x3a] sm:$0xff]
      %v1247 = vld [vmem:[%s1046 + $0x4a] sm:$0xff]
      %v1248 = vld [vmem:[%s1046 + $0x52] sm:$0xff]
      %v1249 = vld [vmem:[%s1046 + $0x62] sm:$0xff]
      %v1250 = vld [vmem:[%s1046 + $0x6a] sm:$0xff]
      %v1251 = vld [vmem:[%s1046 + $0x7a] sm:$0xff]
      %v1252 = vld [vmem:[%s1046 + $0x82] sm:$0xff]
      %v1253 = vld [vmem:[%s1046 + $0x92] sm:$0xff]
      %v1254 = vld [vmem:[%s1046 + $0x9a] sm:$0xff]
      %v1255 = vld [vmem:[%s1046 + $0xaa] sm:$0xff]
      %v1256 = vld [vmem:[%s1046 + $0xb2] sm:$0xff]
      %v1257 = vld [vmem:[%s1046 + $0xc2] sm:$0xff]
      %v1258 = vld [vmem:[%s1046 + $0xca] sm:$0xff]
      %v1259 = vld [vmem:[%s1046 + $0xda] sm:$0xff]
      %v1260 = vld [vmem:[%s1046 + $0xe2] sm:$0xff]
      %v1261 = vld [vmem:[%s1046 + $0xf2] sm:$0xff]
      %v1262 = vld [vmem:[%s1046 + $0xfa] sm:$0xff]
      %v1263 = vld [vmem:[%s1046 + $0x10a] sm:$0xff]
      %v1264 = vld [vmem:[%s1046 + $0x112] sm:$0xff]
      %v1265 = vld [vmem:[%s1046 + $0x122] sm:$0xff]
      %v1266 = vld [vmem:[%s1046 + $0x12a] sm:$0xff]
      %v1267 = vld [vmem:[%s1046 + $0x13a] sm:$0xff]
      %v1268 = vld [vmem:[%s1046 + $0x142] sm:$0xff]
      %v1269 = vld [vmem:[%s1046 + $0x152] sm:$0xff]
      %v1270 = vld [vmem:[%s1046 + $0x15a] sm:$0xff]
      %v1271 = vld [vmem:[%s1046 + $0x16a] sm:$0xff]
      %v1272 = vld [vmem:[%s1046 + $0x172] sm:$0xff]
      %v1273 = vperm.slane %v753, 5
      %v1274 = vmul.f32 %v1241, %v1273
      %v1275 = vmul.f32 %v1242, %v1273
      %v1276 = vmul.f32 %v1243, %v1273
      %v1277 = vmul.f32 %v1244, %v1273
      %v1278 = vmul.f32 %v1245, %v1273
      %v1279 = vmul.f32 %v1246, %v1273
      %v1280 = vmul.f32 %v1247, %v1273
      %v1281 = vmul.f32 %v1248, %v1273
      %v1282 = vmul.f32 %v1249, %v1273
      %v1283 = vmul.f32 %v1250, %v1273
      %v1284 = vmul.f32 %v1251, %v1273
      %v1285 = vmul.f32 %v1252, %v1273
      %v1286 = vmul.f32 %v1253, %v1273
      %v1287 = vmul.f32 %v1254, %v1273
      %v1288 = vmul.f32 %v1255, %v1273
      %v1289 = vmul.f32 %v1256, %v1273
      %v1290 = vmul.f32 %v1257, %v1273
      %v1291 = vmul.f32 %v1258, %v1273
      %v1292 = vmul.f32 %v1259, %v1273
      %v1293 = vmul.f32 %v1260, %v1273
      %v1294 = vmul.f32 %v1261, %v1273
      %v1295 = vmul.f32 %v1262, %v1273
      %v1296 = vmul.f32 %v1263, %v1273
      %v1297 = vmul.f32 %v1264, %v1273
      %v1298 = vmul.f32 %v1265, %v1273
      %v1299 = vmul.f32 %v1266, %v1273
      %v1300 = vmul.f32 %v1267, %v1273
      %v1301 = vmul.f32 %v1268, %v1273
      %v1302 = vmul.f32 %v1269, %v1273
      %v1303 = vmul.f32 %v1270, %v1273
      %v1304 = vmul.f32 %v1271, %v1273
      %v1305 = vmul.f32 %v1272, %v1273
      %v1306 = vadd.f32 %v1209, %v1274
      %v1307 = vadd.f32 %v1210, %v1275
      %v1308 = vadd.f32 %v1211, %v1276
      %v1309 = vadd.f32 %v1212, %v1277
      %v1310 = vadd.f32 %v1213, %v1278
      %v1311 = vadd.f32 %v1214, %v1279
      %v1312 = vadd.f32 %v1215, %v1280
      %v1313 = vadd.f32 %v1216, %v1281
      %v1314 = vadd.f32 %v1217, %v1282
      %v1315 = vadd.f32 %v1218, %v1283
      %v1316 = vadd.f32 %v1219, %v1284
      %v1317 = vadd.f32 %v1220, %v1285
      %v1318 = vadd.f32 %v1221, %v1286
      %v1319 = vadd.f32 %v1222, %v1287
      %v1320 = vadd.f32 %v1223, %v1288
      %v1321 = vadd.f32 %v1224, %v1289
      %v1322 = vadd.f32 %v1225, %v1290
      %v1323 = vadd.f32 %v1226, %v1291
      %v1324 = vadd.f32 %v1227, %v1292
      %v1325 = vadd.f32 %v1228, %v1293
      %v1326 = vadd.f32 %v1229, %v1294
      %v1327 = vadd.f32 %v1230, %v1295
      %v1328 = vadd.f32 %v1231, %v1296
      %v1329 = vadd.f32 %v1232, %v1297
      %v1330 = vadd.f32 %v1233, %v1298
      %v1331 = vadd.f32 %v1234, %v1299
      %v1332 = vadd.f32 %v1235, %v1300
      %v1333 = vadd.f32 %v1236, %v1301
      %v1334 = vadd.f32 %v1237, %v1302
      %v1335 = vadd.f32 %v1238, %v1303
      %v1336 = vadd.f32 %v1239, %v1304
      %v1337 = vadd.f32 %v1240, %v1305
      %s1338 = scalar_lea.vmem [#allocation2], 48
      %v1339 = vld [vmem:[%s1338] sm:$0xff]
      %v1340 = vld [vmem:[%s1338 + $0x8] sm:$0xff]
      %v1341 = vld [vmem:[%s1338 + $0x18] sm:$0xff]
      %v1342 = vld [vmem:[%s1338 + $0x20] sm:$0xff]
      %v1343 = vld [vmem:[%s1338 + $0x30] sm:$0xff]
      %v1344 = vld [vmem:[%s1338 + $0x38] sm:$0xff]
      %v1345 = vld [vmem:[%s1338 + $0x48] sm:$0xff]
      %v1346 = vld [vmem:[%s1338 + $0x50] sm:$0xff]
      %v1347 = vld [vmem:[%s1338 + $0x60] sm:$0xff]
      %v1348 = vld [vmem:[%s1338 + $0x68] sm:$0xff]
      %v1349 = vld [vmem:[%s1338 + $0x78] sm:$0xff]
      %v1350 = vld [vmem:[%s1338 + $0x80] sm:$0xff]
      %v1351 = vld [vmem:[%s1338 + $0x90] sm:$0xff]
      %v1352 = vld [vmem:[%s1338 + $0x98] sm:$0xff]
      %v1353 = vld [vmem:[%s1338 + $0xa8] sm:$0xff]
      %v1354 = vld [vmem:[%s1338 + $0xb0] sm:$0xff]
      %v1355 = vld [vmem:[%s1338 + $0xc0] sm:$0xff]
      %v1356 = vld [vmem:[%s1338 + $0xc8] sm:$0xff]
      %v1357 = vld [vmem:[%s1338 + $0xd8] sm:$0xff]
      %v1358 = vld [vmem:[%s1338 + $0xe0] sm:$0xff]
      %v1359 = vld [vmem:[%s1338 + $0xf0] sm:$0xff]
      %v1360 = vld [vmem:[%s1338 + $0xf8] sm:$0xff]
      %v1361 = vld [vmem:[%s1338 + $0x108] sm:$0xff]
      %v1362 = vld [vmem:[%s1338 + $0x110] sm:$0xff]
      %v1363 = vld [vmem:[%s1338 + $0x120] sm:$0xff]
      %v1364 = vld [vmem:[%s1338 + $0x128] sm:$0xff]
      %v1365 = vld [vmem:[%s1338 + $0x138] sm:$0xff]
      %v1366 = vld [vmem:[%s1338 + $0x140] sm:$0xff]
      %v1367 = vld [vmem:[%s1338 + $0x150] sm:$0xff]
      %v1368 = vld [vmem:[%s1338 + $0x158] sm:$0xff]
      %v1369 = vld [vmem:[%s1338 + $0x168] sm:$0xff]
      %v1370 = vld [vmem:[%s1338 + $0x170] sm:$0xff]
      %v1371 = vperm.slane %v753, 6
      %v1372 = vmul.f32 %v1339, %v1371
      %v1373 = vmul.f32 %v1340, %v1371
      %v1374 = vmul.f32 %v1341, %v1371
      %v1375 = vmul.f32 %v1342, %v1371
      %v1376 = vmul.f32 %v1343, %v1371
      %v1377 = vmul.f32 %v1344, %v1371
      %v1378 = vmul.f32 %v1345, %v1371
      %v1379 = vmul.f32 %v1346, %v1371
      %v1380 = vmul.f32 %v1347, %v1371
      %v1381 = vmul.f32 %v1348, %v1371
      %v1382 = vmul.f32 %v1349, %v1371
      %v1383 = vmul.f32 %v1350, %v1371
      %v1384 = vmul.f32 %v1351, %v1371
      %v1385 = vmul.f32 %v1352, %v1371
      %v1386 = vmul.f32 %v1353, %v1371
      %v1387 = vmul.f32 %v1354, %v1371
      %v1388 = vmul.f32 %v1355, %v1371
      %v1389 = vmul.f32 %v1356, %v1371
      %v1390 = vmul.f32 %v1357, %v1371
      %v1391 = vmul.f32 %v1358, %v1371
      %v1392 = vmul.f32 %v1359, %v1371
      %v1393 = vmul.f32 %v1360, %v1371
      %v1394 = vmul.f32 %v1361, %v1371
      %v1395 = vmul.f32 %v1362, %v1371
      %v1396 = vmul.f32 %v1363, %v1371
      %v1397 = vmul.f32 %v1364, %v1371
      %v1398 = vmul.f32 %v1365, %v1371
      %v1399 = vmul.f32 %v1366, %v1371
      %v1400 = vmul.f32 %v1367, %v1371
      %v1401 = vmul.f32 %v1368, %v1371
      %v1402 = vmul.f32 %v1369, %v1371
      %v1403 = vmul.f32 %v1370, %v1371
      %v1404 = vadd.f32 %v1306, %v1372
      %v1405 = vadd.f32 %v1307, %v1373
      %v1406 = vadd.f32 %v1308, %v1374
      %v1407 = vadd.f32 %v1309, %v1375
      %v1408 = vadd.f32 %v1310, %v1376
      %v1409 = vadd.f32 %v1311, %v1377
      %v1410 = vadd.f32 %v1312, %v1378
      %v1411 = vadd.f32 %v1313, %v1379
      %v1412 = vadd.f32 %v1314, %v1380
      %v1413 = vadd.f32 %v1315, %v1381
      %v1414 = vadd.f32 %v1316, %v1382
      %v1415 = vadd.f32 %v1317, %v1383
      %v1416 = vadd.f32 %v1318, %v1384
      %v1417 = vadd.f32 %v1319, %v1385
      %v1418 = vadd.f32 %v1320, %v1386
      %v1419 = vadd.f32 %v1321, %v1387
      %v1420 = vadd.f32 %v1322, %v1388
      %v1421 = vadd.f32 %v1323, %v1389
      %v1422 = vadd.f32 %v1324, %v1390
      %v1423 = vadd.f32 %v1325, %v1391
      %v1424 = vadd.f32 %v1326, %v1392
      %v1425 = vadd.f32 %v1327, %v1393
      %v1426 = vadd.f32 %v1328, %v1394
      %v1427 = vadd.f32 %v1329, %v1395
      %v1428 = vadd.f32 %v1330, %v1396
      %v1429 = vadd.f32 %v1331, %v1397
      %v1430 = vadd.f32 %v1332, %v1398
      %v1431 = vadd.f32 %v1333, %v1399
      %v1432 = vadd.f32 %v1334, %v1400
      %v1433 = vadd.f32 %v1335, %v1401
      %v1434 = vadd.f32 %v1336, %v1402
      %v1435 = vadd.f32 %v1337, %v1403
      %v1436 = vld [vmem:[%s1338 + $0x1] sm:$0xff]
      %v1437 = vld [vmem:[%s1338 + $0x9] sm:$0xff]
      %v1438 = vld [vmem:[%s1338 + $0x19] sm:$0xff]
      %v1439 = vld [vmem:[%s1338 + $0x21] sm:$0xff]
      %v1440 = vld [vmem:[%s1338 + $0x31] sm:$0xff]
      %v1441 = vld [vmem:[%s1338 + $0x39] sm:$0xff]
      %v1442 = vld [vmem:[%s1338 + $0x49] sm:$0xff]
      %v1443 = vld [vmem:[%s1338 + $0x51] sm:$0xff]
      %v1444 = vld [vmem:[%s1338 + $0x61] sm:$0xff]
      %v1445 = vld [vmem:[%s1338 + $0x69] sm:$0xff]
      %v1446 = vld [vmem:[%s1338 + $0x79] sm:$0xff]
      %v1447 = vld [vmem:[%s1338 + $0x81] sm:$0xff]
      %v1448 = vld [vmem:[%s1338 + $0x91] sm:$0xff]
      %v1449 = vld [vmem:[%s1338 + $0x99] sm:$0xff]
      %v1450 = vld [vmem:[%s1338 + $0xa9] sm:$0xff]
      %v1451 = vld [vmem:[%s1338 + $0xb1] sm:$0xff]
      %v1452 = vld [vmem:[%s1338 + $0xc1] sm:$0xff]
      %v1453 = vld [vmem:[%s1338 + $0xc9] sm:$0xff]
      %v1454 = vld [vmem:[%s1338 + $0xd9] sm:$0xff]
      %v1455 = vld [vmem:[%s1338 + $0xe1] sm:$0xff]
      %v1456 = vld [vmem:[%s1338 + $0xf1] sm:$0xff]
      %v1457 = vld [vmem:[%s1338 + $0xf9] sm:$0xff]
      %v1458 = vld [vmem:[%s1338 + $0x109] sm:$0xff]
      %v1459 = vld [vmem:[%s1338 + $0x111] sm:$0xff]
      %v1460 = vld [vmem:[%s1338 + $0x121] sm:$0xff]
      %v1461 = vld [vmem:[%s1338 + $0x129] sm:$0xff]
      %v1462 = vld [vmem:[%s1338 + $0x139] sm:$0xff]
      %v1463 = vld [vmem:[%s1338 + $0x141] sm:$0xff]
      %v1464 = vld [vmem:[%s1338 + $0x151] sm:$0xff]
      %v1465 = vld [vmem:[%s1338 + $0x159] sm:$0xff]
      %v1466 = vld [vmem:[%s1338 + $0x169] sm:$0xff]
      %v1467 = vld [vmem:[%s1338 + $0x171] sm:$0xff]
      %v1468 = vperm.slane %v753, 7
      %v1469 = vmul.f32 %v1436, %v1468
      %v1470 = vmul.f32 %v1437, %v1468
      %v1471 = vmul.f32 %v1438, %v1468
      %v1472 = vmul.f32 %v1439, %v1468
      %v1473 = vmul.f32 %v1440, %v1468
      %v1474 = vmul.f32 %v1441, %v1468
      %v1475 = vmul.f32 %v1442, %v1468
      %v1476 = vmul.f32 %v1443, %v1468
      %v1477 = vmul.f32 %v1444, %v1468
      %v1478 = vmul.f32 %v1445, %v1468
      %v1479 = vmul.f32 %v1446, %v1468
      %v1480 = vmul.f32 %v1447, %v1468
      %v1481 = vmul.f32 %v1448, %v1468
      %v1482 = vmul.f32 %v1449, %v1468
      %v1483 = vmul.f32 %v1450, %v1468
      %v1484 = vmul.f32 %v1451, %v1468
      %v1485 = vmul.f32 %v1452, %v1468
      %v1486 = vmul.f32 %v1453, %v1468
      %v1487 = vmul.f32 %v1454, %v1468
      %v1488 = vmul.f32 %v1455, %v1468
      %v1489 = vmul.f32 %v1456, %v1468
      %v1490 = vmul.f32 %v1457, %v1468
      %v1491 = vmul.f32 %v1458, %v1468
      %v1492 = vmul.f32 %v1459, %v1468
      %v1493 = vmul.f32 %v1460, %v1468
      %v1494 = vmul.f32 %v1461, %v1468
      %v1495 = vmul.f32 %v1462, %v1468
      %v1496 = vmul.f32 %v1463, %v1468
      %v1497 = vmul.f32 %v1464, %v1468
      %v1498 = vmul.f32 %v1465, %v1468
      %v1499 = vmul.f32 %v1466, %v1468
      %v1500 = vmul.f32 %v1467, %v1468
      %v1501 = vadd.f32 %v1404, %v1469
      %v1502 = vadd.f32 %v1405, %v1470
      %v1503 = vadd.f32 %v1406, %v1471
      %v1504 = vadd.f32 %v1407, %v1472
      %v1505 = vadd.f32 %v1408, %v1473
      %v1506 = vadd.f32 %v1409, %v1474
      %v1507 = vadd.f32 %v1410, %v1475
      %v1508 = vadd.f32 %v1411, %v1476
      %v1509 = vadd.f32 %v1412, %v1477
      %v1510 = vadd.f32 %v1413, %v1478
      %v1511 = vadd.f32 %v1414, %v1479
      %v1512 = vadd.f32 %v1415, %v1480
      %v1513 = vadd.f32 %v1416, %v1481
      %v1514 = vadd.f32 %v1417, %v1482
      %v1515 = vadd.f32 %v1418, %v1483
      %v1516 = vadd.f32 %v1419, %v1484
      %v1517 = vadd.f32 %v1420, %v1485
      %v1518 = vadd.f32 %v1421, %v1486
      %v1519 = vadd.f32 %v1422, %v1487
      %v1520 = vadd.f32 %v1423, %v1488
      %v1521 = vadd.f32 %v1424, %v1489
      %v1522 = vadd.f32 %v1425, %v1490
      %v1523 = vadd.f32 %v1426, %v1491
      %v1524 = vadd.f32 %v1427, %v1492
      %v1525 = vadd.f32 %v1428, %v1493
      %v1526 = vadd.f32 %v1429, %v1494
      %v1527 = vadd.f32 %v1430, %v1495
      %v1528 = vadd.f32 %v1431, %v1496
      %v1529 = vadd.f32 %v1432, %v1497
      %v1530 = vadd.f32 %v1433, %v1498
      %v1531 = vadd.f32 %v1434, %v1499
      %v1532 = vadd.f32 %v1435, %v1500
      %v1533 = vld [vmem:[%s1338 + $0x2] sm:$0xff]
      %v1534 = vld [vmem:[%s1338 + $0xa] sm:$0xff]
      %v1535 = vld [vmem:[%s1338 + $0x1a] sm:$0xff]
      %v1536 = vld [vmem:[%s1338 + $0x22] sm:$0xff]
      %v1537 = vld [vmem:[%s1338 + $0x32] sm:$0xff]
      %v1538 = vld [vmem:[%s1338 + $0x3a] sm:$0xff]
      %v1539 = vld [vmem:[%s1338 + $0x4a] sm:$0xff]
      %v1540 = vld [vmem:[%s1338 + $0x52] sm:$0xff]
      %v1541 = vld [vmem:[%s1338 + $0x62] sm:$0xff]
      %v1542 = vld [vmem:[%s1338 + $0x6a] sm:$0xff]
      %v1543 = vld [vmem:[%s1338 + $0x7a] sm:$0xff]
      %v1544 = vld [vmem:[%s1338 + $0x82] sm:$0xff]
      %v1545 = vld [vmem:[%s1338 + $0x92] sm:$0xff]
      %v1546 = vld [vmem:[%s1338 + $0x9a] sm:$0xff]
      %v1547 = vld [vmem:[%s1338 + $0xaa] sm:$0xff]
      %v1548 = vld [vmem:[%s1338 + $0xb2] sm:$0xff]
      %v1549 = vld [vmem:[%s1338 + $0xc2] sm:$0xff]
      %v1550 = vld [vmem:[%s1338 + $0xca] sm:$0xff]
      %v1551 = vld [vmem:[%s1338 + $0xda] sm:$0xff]
      %v1552 = vld [vmem:[%s1338 + $0xe2] sm:$0xff]
      %v1553 = vld [vmem:[%s1338 + $0xf2] sm:$0xff]
      %v1554 = vld [vmem:[%s1338 + $0xfa] sm:$0xff]
      %v1555 = vld [vmem:[%s1338 + $0x10a] sm:$0xff]
      %v1556 = vld [vmem:[%s1338 + $0x112] sm:$0xff]
      %v1557 = vld [vmem:[%s1338 + $0x122] sm:$0xff]
      %v1558 = vld [vmem:[%s1338 + $0x12a] sm:$0xff]
      %v1559 = vld [vmem:[%s1338 + $0x13a] sm:$0xff]
      %v1560 = vld [vmem:[%s1338 + $0x142] sm:$0xff]
      %v1561 = vld [vmem:[%s1338 + $0x152] sm:$0xff]
      %v1562 = vld [vmem:[%s1338 + $0x15a] sm:$0xff]
      %v1563 = vld [vmem:[%s1338 + $0x16a] sm:$0xff]
      %v1564 = vld [vmem:[%s1338 + $0x172] sm:$0xff]
      %v1565 = vperm.slane %v754, 0
      %v1566 = vmul.f32 %v1533, %v1565
      %v1567 = vmul.f32 %v1534, %v1565
      %v1568 = vmul.f32 %v1535, %v1565
      %v1569 = vmul.f32 %v1536, %v1565
      %v1570 = vmul.f32 %v1537, %v1565
      %v1571 = vmul.f32 %v1538, %v1565
      %v1572 = vmul.f32 %v1539, %v1565
      %v1573 = vmul.f32 %v1540, %v1565
      %v1574 = vmul.f32 %v1541, %v1565
      %v1575 = vmul.f32 %v1542, %v1565
      %v1576 = vmul.f32 %v1543, %v1565
      %v1577 = vmul.f32 %v1544, %v1565
      %v1578 = vmul.f32 %v1545, %v1565
      %v1579 = vmul.f32 %v1546, %v1565
      %v1580 = vmul.f32 %v1547, %v1565
      %v1581 = vmul.f32 %v1548, %v1565
      %v1582 = vmul.f32 %v1549, %v1565
      %v1583 = vmul.f32 %v1550, %v1565
      %v1584 = vmul.f32 %v1551, %v1565
      %v1585 = vmul.f32 %v1552, %v1565
      %v1586 = vmul.f32 %v1553, %v1565
      %v1587 = vmul.f32 %v1554, %v1565
      %v1588 = vmul.f32 %v1555, %v1565
      %v1589 = vmul.f32 %v1556, %v1565
      %v1590 = vmul.f32 %v1557, %v1565
      %v1591 = vmul.f32 %v1558, %v1565
      %v1592 = vmul.f32 %v1559, %v1565
      %v1593 = vmul.f32 %v1560, %v1565
      %v1594 = vmul.f32 %v1561, %v1565
      %v1595 = vmul.f32 %v1562, %v1565
      %v1596 = vmul.f32 %v1563, %v1565
      %v1597 = vmul.f32 %v1564, %v1565
      %v1598 = vadd.f32 %v1501, %v1566
      %v1599 = vadd.f32 %v1502, %v1567
      %v1600 = vadd.f32 %v1503, %v1568
      %v1601 = vadd.f32 %v1504, %v1569
      %v1602 = vadd.f32 %v1505, %v1570
      %v1603 = vadd.f32 %v1506, %v1571
      %v1604 = vadd.f32 %v1507, %v1572
      %v1605 = vadd.f32 %v1508, %v1573
      %v1606 = vadd.f32 %v1509, %v1574
      %v1607 = vadd.f32 %v1510, %v1575
      %v1608 = vadd.f32 %v1511, %v1576
      %v1609 = vadd.f32 %v1512, %v1577
      %v1610 = vadd.f32 %v1513, %v1578
      %v1611 = vadd.f32 %v1514, %v1579
      %v1612 = vadd.f32 %v1515, %v1580
      %v1613 = vadd.f32 %v1516, %v1581
      %v1614 = vadd.f32 %v1517, %v1582
      %v1615 = vadd.f32 %v1518, %v1583
      %v1616 = vadd.f32 %v1519, %v1584
      %v1617 = vadd.f32 %v1520, %v1585
      %v1618 = vadd.f32 %v1521, %v1586
      %v1619 = vadd.f32 %v1522, %v1587
      %v1620 = vadd.f32 %v1523, %v1588
      %v1621 = vadd.f32 %v1524, %v1589
      %v1622 = vadd.f32 %v1525, %v1590
      %v1623 = vadd.f32 %v1526, %v1591
      %v1624 = vadd.f32 %v1527, %v1592
      %v1625 = vadd.f32 %v1528, %v1593
      %v1626 = vadd.f32 %v1529, %v1594
      %v1627 = vadd.f32 %v1530, %v1595
      %v1628 = vadd.f32 %v1531, %v1596
      %v1629 = vadd.f32 %v1532, %v1597
      %v1630 = vld [vmem:[%s4] sm:$0x1]
      %v1632 = vperm.slane %v1630, 0
      %v1634 = vadd.f32 %v1598, %v1632
      %v1635 = vadd.f32 %v1599, %v1632
      %v1636 = vadd.f32 %v1600, %v1632
      %v1637 = vadd.f32 %v1601, %v1632
      %v1638 = vadd.f32 %v1602, %v1632
      %v1639 = vadd.f32 %v1603, %v1632
      %v1640 = vadd.f32 %v1604, %v1632
      %v1641 = vadd.f32 %v1605, %v1632
      %v1642 = vadd.f32 %v1606, %v1632
      %v1643 = vadd.f32 %v1607, %v1632
      %v1644 = vadd.f32 %v1608, %v1632
      %v1645 = vadd.f32 %v1609, %v1632
      %v1646 = vadd.f32 %v1610, %v1632
      %v1647 = vadd.f32 %v1611, %v1632
      %v1648 = vadd.f32 %v1612, %v1632
      %v1649 = vadd.f32 %v1613, %v1632
      %v1650 = vadd.f32 %v1614, %v1632
      %v1651 = vadd.f32 %v1615, %v1632
      %v1652 = vadd.f32 %v1616, %v1632
      %v1653 = vadd.f32 %v1617, %v1632
      %v1654 = vadd.f32 %v1618, %v1632
      %v1655 = vadd.f32 %v1619, %v1632
      %v1656 = vadd.f32 %v1620, %v1632
      %v1657 = vadd.f32 %v1621, %v1632
      %v1658 = vadd.f32 %v1622, %v1632
      %v1659 = vadd.f32 %v1623, %v1632
      %v1660 = vadd.f32 %v1624, %v1632
      %v1661 = vadd.f32 %v1625, %v1632
      %v1662 = vadd.f32 %v1626, %v1632
      %v1663 = vadd.f32 %v1627, %v1632
      %v1664 = vadd.f32 %v1628, %v1632
      %v1665 = vadd.f32 %v1629, %v1632
      %v1666 = vmax.f32 %v1634, 0.0
      %v1667 = vmax.f32 %v1635, 0.0
      %v1668 = vmax.f32 %v1636, 0.0
      %v1669 = vmax.f32 %v1637, 0.0
      %v1670 = vmax.f32 %v1638, 0.0
      %v1671 = vmax.f32 %v1639, 0.0
      %v1672 = vmax.f32 %v1640, 0.0
      %v1673 = vmax.f32 %v1641, 0.0
      %v1674 = vmax.f32 %v1642, 0.0
      %v1675 = vmax.f32 %v1643, 0.0
      %v1676 = vmax.f32 %v1644, 0.0
      %v1677 = vmax.f32 %v1645, 0.0
      %v1678 = vmax.f32 %v1646, 0.0
      %v1679 = vmax.f32 %v1647, 0.0
      %v1680 = vmax.f32 %v1648, 0.0
      %v1681 = vmax.f32 %v1649, 0.0
      %v1682 = vmax.f32 %v1650, 0.0
      %v1683 = vmax.f32 %v1651, 0.0
      %v1684 = vmax.f32 %v1652, 0.0
      %v1685 = vmax.f32 %v1653, 0.0
      %v1686 = vmax.f32 %v1654, 0.0
      %v1687 = vmax.f32 %v1655, 0.0
      %v1688 = vmax.f32 %v1656, 0.0
      %v1689 = vmax.f32 %v1657, 0.0
      %v1690 = vmax.f32 %v1658, 0.0
      %v1691 = vmax.f32 %v1659, 0.0
      %v1692 = vmax.f32 %v1660, 0.0
      %v1693 = vmax.f32 %v1661, 0.0
      %v1694 = vmax.f32 %v1662, 0.0
      %v1695 = vmax.f32 %v1663, 0.0
      %v1696 = vmax.f32 %v1664, 0.0
      %v1697 = vmax.f32 %v1665, 0.0
      %v1698 = vmin.f32 %v1666, 6.0
      %v1699 = vmin.f32 %v1667, 6.0
      %v1700 = vmin.f32 %v1668, 6.0
      %v1701 = vmin.f32 %v1669, 6.0
      %v1702 = vmin.f32 %v1670, 6.0
      %v1703 = vmin.f32 %v1671, 6.0
      %v1704 = vmin.f32 %v1672, 6.0
      %v1705 = vmin.f32 %v1673, 6.0
      %v1706 = vmin.f32 %v1674, 6.0
      %v1707 = vmin.f32 %v1675, 6.0
      %v1708 = vmin.f32 %v1676, 6.0
      %v1709 = vmin.f32 %v1677, 6.0
      %v1710 = vmin.f32 %v1678, 6.0
      %v1711 = vmin.f32 %v1679, 6.0
      %v1712 = vmin.f32 %v1680, 6.0
      %v1713 = vmin.f32 %v1681, 6.0
      %v1714 = vmin.f32 %v1682, 6.0
      %v1715 = vmin.f32 %v1683, 6.0
      %v1716 = vmin.f32 %v1684, 6.0
      %v1717 = vmin.f32 %v1685, 6.0
      %v1718 = vmin.f32 %v1686, 6.0
      %v1719 = vmin.f32 %v1687, 6.0
      %v1720 = vmin.f32 %v1688, 6.0
      %v1721 = vmin.f32 %v1689, 6.0
      %v1722 = vmin.f32 %v1690, 6.0
      %v1723 = vmin.f32 %v1691, 6.0
      %v1724 = vmin.f32 %v1692, 6.0
      %v1725 = vmin.f32 %v1693, 6.0
      %v1726 = vmin.f32 %v1694, 6.0
      %v1727 = vmin.f32 %v1695, 6.0
      %v1728 = vmin.f32 %v1696, 6.0
      %v1729 = vmin.f32 %v1697, 6.0
      %v1730 = vld [vmem:[%s5] sm:$0xff]
      %v1731 = vld [vmem:[%s5 + $0x8] sm:$0xff]
      %v1732 = vld [vmem:[%s5 + $0x10] sm:$0xff]
      %v1733 = vld [vmem:[%s5 + $0x18] sm:$0xff]
      %v1734 = vld [vmem:[%s5 + $0x20] sm:$0xff]
      %v1735 = vld [vmem:[%s5 + $0x28] sm:$0xff]
      %v1736 = vld [vmem:[%s5 + $0x30] sm:$0xff]
      %v1737 = vld [vmem:[%s5 + $0x38] sm:$0xff]
      %v1738 = vld [vmem:[%s5 + $0x40] sm:$0xff]
      %v1739 = vld [vmem:[%s5 + $0x48] sm:$0xff]
      %v1740 = vld [vmem:[%s5 + $0x50] sm:$0xff]
      %v1741 = vld [vmem:[%s5 + $0x58] sm:$0xff]
      %v1742 = vld [vmem:[%s5 + $0x60] sm:$0xff]
      %v1743 = vld [vmem:[%s5 + $0x68] sm:$0xff]
      %v1744 = vld [vmem:[%s5 + $0x70] sm:$0xff]
      %v1745 = vld [vmem:[%s5 + $0x78] sm:$0xff]
      %v1746 = vld [vmem:[%s6] sm:$0x1]
      %v1748 = vperm.slane %v1746, 0
      %1750 = vmatpush.msra.mxu0 %v1745
      %1751 = vmatpush.msra.mxu0 %v1744
      %1752 = vmatpush.msra.mxu0 %v1743
      %1753 = vmatpush.msra.mxu0 %v1742
      %1754 = vmatpush.msra.mxu0 %v1741
      %1755 = vmatpush.msra.mxu0 %v1740
      %1756 = vmatpush.msra.mxu0 %v1739
      %1757 = vmatpush.msra.mxu0 %v1738
      %1758 = vmatpush.msra.mxu0 %v1737
      %1759 = vmatpush.msra.mxu0 %v1736
      %1760 = vmatpush.msra.mxu0 %v1735
      %1761 = vmatpush.msra.mxu0 %v1734
      %1762 = vmatpush.msra.mxu0 %v1733
      %1763 = vmatpush.msra.mxu0 %v1732
      %1764 = vmatpush.msra.mxu0 %v1731
      %1765 = vmatpush.msra.mxu0 %v1730
      %1766 = vmatmul.f32.gmra.mxu0 %v1698
      %v1767 = vpop.f32.mrf.mxu0
      %v1768 = vadd.f32 %v1748, %v1767
      %1769 = vmatmul.f32.gmra.mxu0 %v1699
      %v1770 = vpop.f32.mrf.mxu0
      %v1771 = vadd.f32 %v1748, %v1770
      %1772 = vmatmul.f32.gmra.mxu0 %v1700
      %v1773 = vpop.f32.mrf.mxu0
      %v1774 = vadd.f32 %v1748, %v1773
      %1775 = vmatmul.f32.gmra.mxu0 %v1701
      %v1776 = vpop.f32.mrf.mxu0
      %v1777 = vadd.f32 %v1748, %v1776
      %1778 = vmatmul.f32.gmra.mxu0 %v1702
      %v1779 = vpop.f32.mrf.mxu0
      %v1780 = vadd.f32 %v1748, %v1779
      %1781 = vmatmul.f32.gmra.mxu0 %v1703
      %v1782 = vpop.f32.mrf.mxu0
      %v1783 = vadd.f32 %v1748, %v1782
      %1784 = vmatmul.f32.gmra.mxu0 %v1704
      %v1785 = vpop.f32.mrf.mxu0
      %v1786 = vadd.f32 %v1748, %v1785
      %1787 = vmatmul.f32.gmra.mxu0 %v1705
      %v1788 = vpop.f32.mrf.mxu0
      %v1789 = vadd.f32 %v1748, %v1788
      %1790 = vmatmul.f32.gmra.mxu0 %v1706
      %v1791 = vpop.f32.mrf.mxu0
      %v1792 = vadd.f32 %v1748, %v1791
      %1793 = vmatmul.f32.gmra.mxu0 %v1707
      %v1794 = vpop.f32.mrf.mxu0
      %v1795 = vadd.f32 %v1748, %v1794
      %1796 = vmatmul.f32.gmra.mxu0 %v1708
      %v1797 = vpop.f32.mrf.mxu0
      %v1798 = vadd.f32 %v1748, %v1797
      %1799 = vmatmul.f32.gmra.mxu0 %v1709
      %v1800 = vpop.f32.mrf.mxu0
      %v1801 = vadd.f32 %v1748, %v1800
      %1802 = vmatmul.f32.gmra.mxu0 %v1710
      %v1803 = vpop.f32.mrf.mxu0
      %v1804 = vadd.f32 %v1748, %v1803
      %1805 = vmatmul.f32.gmra.mxu0 %v1711
      %v1806 = vpop.f32.mrf.mxu0
      %v1807 = vadd.f32 %v1748, %v1806
      %1808 = vmatmul.f32.gmra.mxu0 %v1712
      %v1809 = vpop.f32.mrf.mxu0
      %v1810 = vadd.f32 %v1748, %v1809
      %1811 = vmatmul.f32.gmra.mxu0 %v1713
      %v1812 = vpop.f32.mrf.mxu0
      %v1813 = vadd.f32 %v1748, %v1812
      %1814 = vmatmul.f32.gmra.mxu0 %v1714
      %v1815 = vpop.f32.mrf.mxu0
      %v1816 = vadd.f32 %v1748, %v1815
      %1817 = vmatmul.f32.gmra.mxu0 %v1715
      %v1818 = vpop.f32.mrf.mxu0
      %v1819 = vadd.f32 %v1748, %v1818
      %1820 = vmatmul.f32.gmra.mxu0 %v1716
      %v1821 = vpop.f32.mrf.mxu0
      %v1822 = vadd.f32 %v1748, %v1821
      %1823 = vmatmul.f32.gmra.mxu0 %v1717
      %v1824 = vpop.f32.mrf.mxu0
      %v1825 = vadd.f32 %v1748, %v1824
      %1826 = vmatmul.f32.gmra.mxu0 %v1718
      %v1827 = vpop.f32.mrf.mxu0
      %v1828 = vadd.f32 %v1748, %v1827
      %1829 = vmatmul.f32.gmra.mxu0 %v1719
      %v1830 = vpop.f32.mrf.mxu0
      %v1831 = vadd.f32 %v1748, %v1830
      %1832 = vmatmul.f32.gmra.mxu0 %v1720
      %v1833 = vpop.f32.mrf.mxu0
      %v1834 = vadd.f32 %v1748, %v1833
      %1835 = vmatmul.f32.gmra.mxu0 %v1721
      %v1836 = vpop.f32.mrf.mxu0
      %v1837 = vadd.f32 %v1748, %v1836
      %1838 = vmatmul.f32.gmra.mxu0 %v1722
      %v1839 = vpop.f32.mrf.mxu0
      %v1840 = vadd.f32 %v1748, %v1839
      %1841 = vmatmul.f32.gmra.mxu0 %v1723
      %v1842 = vpop.f32.mrf.mxu0
      %v1843 = vadd.f32 %v1748, %v1842
      %1844 = vmatmul.f32.gmra.mxu0 %v1724
      %v1845 = vpop.f32.mrf.mxu0
      %v1846 = vadd.f32 %v1748, %v1845
      %1847 = vmatmul.f32.gmra.mxu0 %v1725
      %v1848 = vpop.f32.mrf.mxu0
      %v1849 = vadd.f32 %v1748, %v1848
      %1850 = vmatmul.f32.gmra.mxu0 %v1726
      %v1851 = vpop.f32.mrf.mxu0
      %v1852 = vadd.f32 %v1748, %v1851
      %1853 = vmatmul.f32.gmra.mxu0 %v1727
      %v1854 = vpop.f32.mrf.mxu0
      %v1855 = vadd.f32 %v1748, %v1854
      %1856 = vmatmul.f32.gmra.mxu0 %v1728
      %v1857 = vpop.f32.mrf.mxu0
      %v1858 = vadd.f32 %v1748, %v1857
      %1859 = vmatmul.f32.gmra.mxu0 %v1729
      %v1860 = vpop.f32.mrf.mxu0
      %v1861 = vadd.f32 %v1748, %v1860
      %1862 = vdwg.mxu0
      %v1863 = vlaneseq
      %v1864 = vshrl.u32 %v1863, 7
      %v1865 = vlaneseq
      %v1866 = vand.u32 %v1865, 127
      %vm1867 = vcmp.eq.s32.totalorder %v1864, %v1866
      %v1868 = vsel %vm1867, 1, 0
      %v1869 = vcvt.s32.f32 %v1868
      %v1871 = vsel %vm467, %v1869, 0
      %1873 = vmatpush.msra.mxu0 0.0
      %1874 = vmatpush.msra.mxu0 0.0
      %1875 = vmatpush.msra.mxu0 0.0
      %1876 = vmatpush.msra.mxu0 0.0
      %1877 = vmatpush.msra.mxu0 0.0
      %1878 = vmatpush.msra.mxu0 0.0
      %1879 = vmatpush.msra.mxu0 0.0
      %1880 = vmatpush.msra.mxu0 0.0
      %1881 = vmatpush.msra.mxu0 0.0
      %1882 = vmatpush.msra.mxu0 0.0
      %1883 = vmatpush.msra.mxu0 0.0
      %1884 = vmatpush.msra.mxu0 0.0
      %1885 = vmatpush.msra.mxu0 0.0
      %1886 = vmatpush.msra.mxu0 0.0
      %1887 = vmatpush.msra.mxu0 0.0
      %1888 = vmatpush.msra.mxu0 %v1871
      %1889 = vmatmul.f32.gmra.mxu0 %v366
      %v1890 = vpop.f32.mrf.mxu0
      %v1891 = vadd.f32 0.0, %v1890
      %1892 = vmatmul.f32.gmra.mxu0 %v369
      %v1893 = vpop.f32.mrf.mxu0
      %v1894 = vadd.f32 0.0, %v1893
      %1895 = vmatmul.f32.gmra.mxu0 %v372
      %v1896 = vpop.f32.mrf.mxu0
      %v1897 = vadd.f32 0.0, %v1896
      %1898 = vmatmul.f32.gmra.mxu0 %v375
      %v1899 = vpop.f32.mrf.mxu0
      %v1900 = vadd.f32 0.0, %v1899
      %1901 = vmatmul.f32.gmra.mxu0 %v378
      %v1902 = vpop.f32.mrf.mxu0
      %v1903 = vadd.f32 0.0, %v1902
      %1904 = vmatmul.f32.gmra.mxu0 %v381
      %v1905 = vpop.f32.mrf.mxu0
      %v1906 = vadd.f32 0.0, %v1905
      %1907 = vmatmul.f32.gmra.mxu0 %v384
      %v1908 = vpop.f32.mrf.mxu0
      %v1909 = vadd.f32 0.0, %v1908
      %1910 = vmatmul.f32.gmra.mxu0 %v387
      %v1911 = vpop.f32.mrf.mxu0
      %v1912 = vadd.f32 0.0, %v1911
      %1913 = vmatmul.f32.gmra.mxu0 %v390
      %v1914 = vpop.f32.mrf.mxu0
      %v1915 = vadd.f32 0.0, %v1914
      %1916 = vmatmul.f32.gmra.mxu0 %v393
      %v1917 = vpop.f32.mrf.mxu0
      %v1918 = vadd.f32 0.0, %v1917
      %1919 = vmatmul.f32.gmra.mxu0 %v396
      %v1920 = vpop.f32.mrf.mxu0
      %v1921 = vadd.f32 0.0, %v1920
      %1922 = vmatmul.f32.gmra.mxu0 %v399
      %v1923 = vpop.f32.mrf.mxu0
      %v1924 = vadd.f32 0.0, %v1923
      %1925 = vmatmul.f32.gmra.mxu0 %v402
      %v1926 = vpop.f32.mrf.mxu0
      %v1927 = vadd.f32 0.0, %v1926
      %1928 = vmatmul.f32.gmra.mxu0 %v405
      %v1929 = vpop.f32.mrf.mxu0
      %v1930 = vadd.f32 0.0, %v1929
      %1931 = vmatmul.f32.gmra.mxu0 %v408
      %v1932 = vpop.f32.mrf.mxu0
      %v1933 = vadd.f32 0.0, %v1932
      %1934 = vmatmul.f32.gmra.mxu0 %v411
      %v1935 = vpop.f32.mrf.mxu0
      %v1936 = vadd.f32 0.0, %v1935
      %1937 = vmatmul.f32.gmra.mxu0 %v414
      %v1938 = vpop.f32.mrf.mxu0
      %v1939 = vadd.f32 0.0, %v1938
      %1940 = vmatmul.f32.gmra.mxu0 %v417
      %v1941 = vpop.f32.mrf.mxu0
      %v1942 = vadd.f32 0.0, %v1941
      %1943 = vmatmul.f32.gmra.mxu0 %v420
      %v1944 = vpop.f32.mrf.mxu0
      %v1945 = vadd.f32 0.0, %v1944
      %1946 = vmatmul.f32.gmra.mxu0 %v423
      %v1947 = vpop.f32.mrf.mxu0
      %v1948 = vadd.f32 0.0, %v1947
      %1949 = vmatmul.f32.gmra.mxu0 %v426
      %v1950 = vpop.f32.mrf.mxu0
      %v1951 = vadd.f32 0.0, %v1950
      %1952 = vmatmul.f32.gmra.mxu0 %v429
      %v1953 = vpop.f32.mrf.mxu0
      %v1954 = vadd.f32 0.0, %v1953
      %1955 = vmatmul.f32.gmra.mxu0 %v432
      %v1956 = vpop.f32.mrf.mxu0
      %v1957 = vadd.f32 0.0, %v1956
      %1958 = vmatmul.f32.gmra.mxu0 %v435
      %v1959 = vpop.f32.mrf.mxu0
      %v1960 = vadd.f32 0.0, %v1959
      %1961 = vmatmul.f32.gmra.mxu0 %v438
      %v1962 = vpop.f32.mrf.mxu0
      %v1963 = vadd.f32 0.0, %v1962
      %1964 = vmatmul.f32.gmra.mxu0 %v441
      %v1965 = vpop.f32.mrf.mxu0
      %v1966 = vadd.f32 0.0, %v1965
      %1967 = vmatmul.f32.gmra.mxu0 %v444
      %v1968 = vpop.f32.mrf.mxu0
      %v1969 = vadd.f32 0.0, %v1968
      %1970 = vmatmul.f32.gmra.mxu0 %v447
      %v1971 = vpop.f32.mrf.mxu0
      %v1972 = vadd.f32 0.0, %v1971
      %1973 = vmatmul.f32.gmra.mxu0 %v450
      %v1974 = vpop.f32.mrf.mxu0
      %v1975 = vadd.f32 0.0, %v1974
      %1976 = vmatmul.f32.gmra.mxu0 %v453
      %v1977 = vpop.f32.mrf.mxu0
      %v1978 = vadd.f32 0.0, %v1977
      %1979 = vmatmul.f32.gmra.mxu0 %v456
      %v1980 = vpop.f32.mrf.mxu0
      %v1981 = vadd.f32 0.0, %v1980
      %1982 = vmatmul.f32.gmra.mxu0 %v459
      %v1983 = vpop.f32.mrf.mxu0
      %v1984 = vadd.f32 0.0, %v1983
      %1985 = vdwg.mxu0
      %v1986 = vadd.f32 %v1768, %v1891
      %v1987 = vadd.f32 %v1771, %v1894
      %v1988 = vadd.f32 %v1774, %v1897
      %v1989 = vadd.f32 %v1777, %v1900
      %v1990 = vadd.f32 %v1780, %v1903
      %v1991 = vadd.f32 %v1783, %v1906
      %v1992 = vadd.f32 %v1786, %v1909
      %v1993 = vadd.f32 %v1789, %v1912
      %v1994 = vadd.f32 %v1792, %v1915
      %v1995 = vadd.f32 %v1795, %v1918
      %v1996 = vadd.f32 %v1798, %v1921
      %v1997 = vadd.f32 %v1801, %v1924
      %v1998 = vadd.f32 %v1804, %v1927
      %v1999 = vadd.f32 %v1807, %v1930
      %v2000 = vadd.f32 %v1810, %v1933
      %v2001 = vadd.f32 %v1813, %v1936
      %v2002 = vadd.f32 %v1816, %v1939
      %v2003 = vadd.f32 %v1819, %v1942
      %v2004 = vadd.f32 %v1822, %v1945
      %v2005 = vadd.f32 %v1825, %v1948
      %v2006 = vadd.f32 %v1828, %v1951
      %v2007 = vadd.f32 %v1831, %v1954
      %v2008 = vadd.f32 %v1834, %v1957
      %v2009 = vadd.f32 %v1837, %v1960
      %v2010 = vadd.f32 %v1840, %v1963
      %v2011 = vadd.f32 %v1843, %v1966
      %v2012 = vadd.f32 %v1846, %v1969
      %v2013 = vadd.f32 %v1849, %v1972
      %v2014 = vadd.f32 %v1852, %v1975
      %v2015 = vadd.f32 %v1855, %v1978
      %v2016 = vadd.f32 %v1858, %v1981
      %v2017 = vadd.f32 %v1861, %v1984
      %2018 = vst [vmem:[%s302] sm:$0xff] %v1986
      %2019 = vst [vmem:[%s302 + $0x8] sm:$0xff] %v1987
      %2020 = vst [vmem:[%s302 + $0x10] sm:$0xff] %v1988
      %2021 = vst [vmem:[%s302 + $0x18] sm:$0xff] %v1989
      %2022 = vst [vmem:[%s302 + $0x20] sm:$0xff] %v1990
      %2023 = vst [vmem:[%s302 + $0x28] sm:$0xff] %v1991
      %2024 = vst [vmem:[%s302 + $0x30] sm:$0xff] %v1992
      %2025 = vst [vmem:[%s302 + $0x38] sm:$0xff] %v1993
      %2026 = vst [vmem:[%s302 + $0x40] sm:$0xff] %v1994
      %2027 = vst [vmem:[%s302 + $0x48] sm:$0xff] %v1995
      %2028 = vst [vmem:[%s302 + $0x50] sm:$0xff] %v1996
      %2029 = vst [vmem:[%s302 + $0x58] sm:$0xff] %v1997
      %2030 = vst [vmem:[%s302 + $0x60] sm:$0xff] %v1998
      %2031 = vst [vmem:[%s302 + $0x68] sm:$0xff] %v1999
      %2032 = vst [vmem:[%s302 + $0x70] sm:$0xff] %v2000
      %2033 = vst [vmem:[%s302 + $0x78] sm:$0xff] %v2001
      %2034 = vst [vmem:[%s302 + $0x80] sm:$0xff] %v2002
      %2035 = vst [vmem:[%s302 + $0x88] sm:$0xff] %v2003
      %2036 = vst [vmem:[%s302 + $0x90] sm:$0xff] %v2004
      %2037 = vst [vmem:[%s302 + $0x98] sm:$0xff] %v2005
      %2038 = vst [vmem:[%s302 + $0xa0] sm:$0xff] %v2006
      %2039 = vst [vmem:[%s302 + $0xa8] sm:$0xff] %v2007
      %2040 = vst [vmem:[%s302 + $0xb0] sm:$0xff] %v2008
      %2041 = vst [vmem:[%s302 + $0xb8] sm:$0xff] %v2009
      %2042 = vst [vmem:[%s302 + $0xc0] sm:$0xff] %v2010
      %2043 = vst [vmem:[%s302 + $0xc8] sm:$0xff] %v2011
      %2044 = vst [vmem:[%s302 + $0xd0] sm:$0xff] %v2012
      %2045 = vst [vmem:[%s302 + $0xd8] sm:$0xff] %v2013
      %2046 = vst [vmem:[%s302 + $0xe0] sm:$0xff] %v2014
      %2047 = vst [vmem:[%s302 + $0xe8] sm:$0xff] %v2015
      %2048 = vst [vmem:[%s302 + $0xf0] sm:$0xff] %v2016
      %2049 = vst [vmem:[%s302 + $0xf8] sm:$0xff] %v2017
      %s2050 = smul.u32 16, %s23
      %p2051 = scmp.lt.s32.totalorder %s22, 1
      %s2052 = scalar_select %p2051, %s22, 1
      %p2053 = scmp.lt.s32.totalorder %s2050, 15
      %s2054 = scalar_select %p2053, %s2050, 15
      %s2055 = smul.addr %s2054, 2
      %s2056 = smul.addr %s2052, 32
      %s2057 = sadd.s32 %s2055, %s2056
      %s2058 = smul.addr %s2057, 8
      %s2059 = scalar_lea.vmem %s7, %s2058
      // Predicated region
      $region57: #{inverted_residual_bottleneck.1} parent=47 // pred_check
        %p2060 = pneg %p202
      $region58: #{inverted_residual_bottleneck.1} parent=47 // pred_check_branch
        %2062 = sbr.rel (%p2060) target = $region60
      $region59: #{inverted_residual_bottleneck.1} parent=47 // pred_region
        %s2063 = smul.u32 16, %s23
      $region60: #{inverted_residual_bottleneck.1} parent=47 // pred_fallthru
        _
    $region48: #{inverted_residual_bottleneck.1} parent=5 // pred_fallthru
      _
    %p2064 = scmp.le.s32.totalorder 2, %s13
    // Predicated region
    $region61: #{inverted_residual_bottleneck.1} parent=5 // pred_check
      %p2065 = pneg %p2064
    $region62: #{inverted_residual_bottleneck.1} parent=5 // pred_check_branch
      %2067 = sbr.rel (%p2065) target = $region64
    $region63: #{inverted_residual_bottleneck.1} parent=5 // pred_region
      %s2068 = ssub.s32 %s13, 2
      // Predicated region
      $region65: #{inverted_residual_bottleneck.1} parent=63 // pred_check
        %p2069 = pneg %p208
      $region66: #{inverted_residual_bottleneck.1} parent=63 // pred_check_branch
        %2071 = sbr.rel (%p2069) target = $region68
      $region67: #{inverted_residual_bottleneck.1} parent=63 // pred_region
        %s2072 = smul.u32 16, %s25
        %p2073 = scmp.lt.s32.totalorder %s24, 1
        %s2074 = scalar_select %p2073, %s24, 1
        %p2075 = scmp.lt.s32.totalorder %s2072, 15
        %s2076 = scalar_select %p2075, %s2072, 15
        %s2077 = smul.addr %s2076, 2
        %s2078 = smul.addr %s2074, 32
        %s2079 = sadd.s32 %s2077, %s2078
        %s2080 = smul.addr %s2079, 8
        %s2081 = scalar_lea.vmem %s7, %s2080
      $region68: #{inverted_residual_bottleneck.1} parent=63 // pred_fallthru
        _
    $region64: #{inverted_residual_bottleneck.1} parent=5 // pred_fallthru
      _
  $region6: #{inverted_residual_bottleneck.1} parent=0 // loop_footer
    %s17 = sadd.s32 1, %s13
  $region7: #{inverted_residual_bottleneck.1} parent=0 // loop_footer_branch
    %12 = sbr.rel target = $region3
  $region8: #{inverted_residual_bottleneck.1} parent=0 // loop_exit
    _

</llo_original>
